<compile_context>
chip_gen: v6e
topology: v6e:2x2x1
jax: 0.10.0
libtpu: 0.0.40
codegen_flags: <defaults>
</compile_context>

<pallas_src>
import functools

import jax
import jax.numpy as jnp
import numpy as np
from jax import lax
from jax.experimental import pallas as pl
from jax.experimental.pallas import tpu as pltpu

_HIGHEST = jax.lax.Precision.HIGHEST


def _dot_nt(a, b):
    """a: (m, k), b: (n, k) -> (m, n); contract last dims of both operands so
    fused weights can stay in their [out, in] orientation."""
    return lax.dot_general(a, b, (((1,), (1,)), ((), ())),
                           preferred_element_type=jnp.float32,
                           precision=_HIGHEST)


def _dot_nn(a, b):
    """a: (m, k), b: (k, n) -> (m, n)."""
    return lax.dot_general(a, b, (((1,), (0,)), ((), ())),
                           preferred_element_type=jnp.float32,
                           precision=_HIGHEST)


def _window_cls_kernel(n_heads, x_ref, qk_ref, qsum_ref, wc_ref, bo_ref,
                       g_ref, be_ref, wl_ref, bl_ref, out_ref):
    TB, V, N, D = x_ref.shape
    R = qk_ref.shape[0]            # n_heads * n_heads (query-token, head) rows
    H = n_heads
    f32 = jnp.float32

    # Mean over nvars; d_model stays the lane axis throughout (dense VMEM,
    # full 128-lane VPU utilization).
    xm = jnp.mean(x_ref[...].astype(f32), axis=1)                 # (TB, N, D)
    xm2 = xm.reshape(TB * N, D)

    # Attention scores for every (query-token, head) row in ONE large matmul.
    # qk folds Wq, bq, the per-head mask, 1/sqrt(head_dim) and Wk; the key
    # bias shifts each softmax row by a constant -> dropped.
    s = _dot_nt(xm2, qk_ref[...]).reshape(TB, N, R)                # (TB, N, R)
    s = s - jnp.max(s, axis=1, keepdims=True)
    p = jnp.exp(s)
    p = p / jnp.sum(p, axis=1, keepdims=True)                      # softmax over n

    # Mean over the H query tokens of each head: one tiny matmul with the
    # precomputed (R, H) selector (the 1/H factor is folded in).
    pbar = _dot_nn(p.reshape(TB * N, R), qsum_ref[...]).reshape(TB, N, H)

    # u[b, h, :] = sum_n pbar[b, n, h] * xm[b, n, :].  N and H are tiny, so a
    # short unrolled VPU/XLU loop beats TB-way batched matmuls.
    u = [jnp.sum(pbar[:, :, h:h + 1] * xm, axis=1) for h in range(H)]
    uflat = jnp.concatenate(u, axis=-1)                            # (TB, H*D)

    # Head-mask + Wv + Wo are folded into one (D, H*D) weight; the value and
    # output-projection biases are folded into bo_ref by the wrapper.
    om = _dot_nt(uflat, wc_ref[...]) + bo_ref[...]                 # (TB, D)

    # LayerNorm(eps=1e-5) + Linear(d_model, 1).  Output lanes = TB (dense).
    mu = jnp.mean(om, axis=-1, keepdims=True)
    var = jnp.mean((om - mu) ** 2, axis=-1, keepdims=True)
    y = (om - mu) * lax.rsqrt(var + 1e-5)
    y = y * g_ref[...] + be_ref[...]
    out_ref[...] = _dot_nt(wl_ref[...], y) + bl_ref[...]           # (1, TB)


def _round_up(n, m):
    return (n + m - 1) // m * m


def window_classification(x, params, n_heads, *, block_b=None):
    """x: [B, nvars, d_model, n_window] (native PyTorch layout). Returns [B]."""
    B, V, D, N = x.shape
    H = int(n_heads)
    assert D % H == 0, "d_model must be divisible by n_heads"
    hd = D // H
    R = H * H
    f32 = jnp.float32

    # ---- Batch-invariant precomputation (tiny one-time XLA ops) -------------
    q = params["query"].reshape(H, D).astype(f32)
    Q = q @ params["wq"].astype(f32).T + params["bq"].astype(f32)          # (H, D)
    head_of_dim = np.arange(D) // hd
    mask_rd = (head_of_dim[None, :] == (np.arange(R) % H)[:, None])        # (R, D)
    # Row r = (query token r // H, head r % H): masked, pre-scaled query with
    # the key projection folded in (the key bias drops out of the softmax).
    qexp = jnp.repeat(Q, H, axis=0) * jnp.asarray(mask_rd, f32) / np.sqrt(hd)
    qk = qexp @ params["wk"].astype(f32)                                   # (R, D)
    # (R, H) selector: averages the H query tokens of each head (folds 1/H).
    qsum_np = np.zeros((R, H), np.float32)
    qsum_np[np.arange(R), np.arange(R) % H] = 1.0 / H
    qsum = jnp.asarray(qsum_np)
    # Head-mask + Wv + Wo folded into one (D, H*D) weight and one bias.
    wo = params["wo"].astype(f32)
    wv = params["wv"].astype(f32)
    wc = jnp.concatenate(
        [wo[:, h * hd:(h + 1) * hd] @ wv[h * hd:(h + 1) * hd, :] for h in range(H)],
        axis=1)                                                            # (D, H*D)
    bo_eff = (wo @ params["bv"].astype(f32) + params["bo"].astype(f32)).reshape(1, D)

    # ---- Per-generation VMEM budgeting and batch-block sizing ----------------
    try:  # v5e/v6e: 128 MiB, v7x: 64 MiB; conservative fallback if unavailable
        vmem_cap = int(getattr(pltpu.get_tpu_info(), "vmem_capacity_bytes",
                               64 * 1024 * 1024))
    except Exception:
        vmem_cap = 64 * 1024 * 1024
    vmem_limit = int(max(32 * 1024 * 1024,
                         min(0.85 * vmem_cap, 100 * 1024 * 1024)))

    if block_b is None:
        budget = min(int(0.45 * vmem_cap), 56 * 1024 * 1024)
        isz = jnp.dtype(x.dtype).itemsize
        sub = max(1, 32 // max(isz, 1))               # sublane packing of x dtype
        np_x = _round_up(N, sub)
        np8 = _round_up(N, 8)
        dp = _round_up(D, 128)
        rp = _round_up(R, 128)
        # Lane/sublane-padded VMEM footprint per batch row.
        x_row = V * np_x * dp * isz                   # x block, per buffer
        work_row = ((V + 3) * np8 * dp * 4            # f32 cast + xm + temps
                    + 3 * np8 * rp * 4                # scores / softmax tiles
                    + (H + 4) * dp * 4)               # u / uflat / om / y
        row_bytes = 2 * x_row + work_row              # double-buffered x + work
        const_bytes = 2 * 4 * (_round_up(R, 8) * (dp + 128)
                               + dp * _round_up(H * D, 128) + 8 * dp)
        tb = max(1, (budget - const_bytes) // max(row_bytes, 1))
        if tb < B:
            tb = pl.cdiv(B, pl.cdiv(B, tb))           # even blocks -> minimal padding
            if tb >= 128:
                tb = _round_up(tb, 128)               # unmasked (1, TB) output stores
        block_b = min(B, tb)
    TB = int(max(1, block_b))
    G = int(pl.cdiv(B, TB))
    Bp = G * TB

    # One HBM pass over x: permute so d_model is the minor (lane) dim; the grid
    # padding is fused into the same copy.  x keeps its native dtype (the
    # kernel casts per-tile after the DMA).
    xt = jnp.transpose(x, (0, 1, 3, 2))                                    # [B,V,N,D]
    if Bp != B:
        # Zero padding is safe: every op is per-batch-row; padded rows are
        # finite garbage and sliced away below.
        xt = jnp.pad(xt, ((0, Bp - B), (0, 0), (0, 0), (0, 0)))

    def const_spec(shape):
        zeros = (0,) * len(shape)
        return pl.BlockSpec(shape, lambda b, _z=zeros: _z)

    in_specs = [
        pl.BlockSpec((TB, V, N, D), lambda b: (b, 0, 0, 0)),   # x, d_model minor
        const_spec((R, D)),       # fused query (Wq, bq, mask, 1/sqrt(hd), Wk)
        const_spec((R, H)),       # query-token averaging selector
        const_spec((D, H * D)),   # fused head-mask * Wv * Wo
        const_spec((1, D)),       # folded bias (Wo @ bv + bo)
        const_spec((1, D)), const_spec((1, D)),   # LayerNorm gamma, beta
        const_spec((1, D)), const_spec((1, 1)),   # final Linear weight, bias
    ]

    out = pl.pallas_call(
        functools.partial(_window_cls_kernel, H),
        grid=(G,),
        in_specs=in_specs,
        out_specs=pl.BlockSpec((1, TB), lambda b: (b, 0)),
        out_shape=jax.ShapeDtypeStruct((G, TB), jnp.float32),
        compiler_params=pltpu.CompilerParams(
            dimension_semantics=("parallel",),
            vmem_limit_bytes=vmem_limit),
    )(xt, qk, qsum, wc, bo_eff,
      params["ln_g"].reshape(1, D).astype(f32),
      params["ln_b"].reshape(1, D).astype(f32),
      params["lin_w"].reshape(1, D).astype(f32),
      params["lin_b"].reshape(1, 1).astype(f32))
    return out.reshape(Bp)[:B]


def reference(x, params, n_heads):
    """NumPy float64 reference mirroring the PyTorch forward (eval mode)."""
    x = np.asarray(x, np.float64)
    p = {k: np.asarray(v, np.float64) for k, v in params.items()}
    xm = np.transpose(x, (0, 1, 3, 2)).mean(axis=1)                 # [B, N, D]
    B, N, D = xm.shape
    H = n_heads
    hd = D // H
    q = np.broadcast_to(p["query"].reshape(1, H, D), (B, H, D))
    Q = q @ p["wq"].T + p["bq"]
    K = xm @ p["wk"].T + p["bk"]
    V = xm @ p["wv"].T + p["bv"]
    Qh = Q.reshape(B, H, H, hd).transpose(0, 2, 1, 3)
    Kh = K.reshape(B, N, H, hd).transpose(0, 2, 1, 3)
    Vh = V.reshape(B, N, H, hd).transpose(0, 2, 1, 3)
    s = np.einsum("bhqd,bhkd->bhqk", Qh, Kh) / np.sqrt(hd)
    s = s - s.max(axis=-1, keepdims=True)
    pw = np.exp(s)
    pw = pw / pw.sum(axis=-1, keepdims=True)
    o = np.einsum("bhqk,bhkd->bhqd", pw, Vh).transpose(0, 2, 1, 3).reshape(B, H, D)
    o = o @ p["wo"].T + p["bo"]
    om = o.mean(axis=1)
    mu = om.mean(axis=-1, keepdims=True)
    var = ((om - mu) ** 2).mean(axis=-1, keepdims=True)
    y = (om - mu) / np.sqrt(var + 1e-5)
    y = y * p["ln_g"] + p["ln_b"]
    return (y @ p["lin_w"].T + p["lin_b"]).squeeze(-1)


def init_params(key, d_model, n_heads):
    ks = jax.random.split(key, 12)
    s = 0.05
    f32 = jnp.float32
    return {
        "query": jax.random.normal(ks[0], (1, n_heads, d_model), f32),
        "wq": s * jax.random.normal(ks[1], (d_model, d_model), f32),
        "wk": s * jax.random.normal(ks[2], (d_model, d_model), f32),
        "wv": s * jax.random.normal(ks[3], (d_model, d_model), f32),
        "bq": s * jax.random.normal(ks[4], (d_model,), f32),
        "bk": s * jax.random.normal(ks[5], (d_model,), f32),
        "bv": s * jax.random.normal(ks[6], (d_model,), f32),
        "wo": s * jax.random.normal(ks[7], (d_model, d_model), f32),
        "bo": s * jax.random.normal(ks[8], (d_model,), f32),
        "ln_g": jnp.ones((d_model,), f32),
        "ln_b": jnp.zeros((d_model,), f32),
        "lin_w": s * jax.random.normal(ks[9], (1, d_model), f32),
        "lin_b": s * jax.random.normal(ks[10], (1,), f32),
    }


if __name__ == "__main__":
    # TODO(synk): self.cls_fusion (TransformerEncoderLayer) is constructed in
    # __init__ but never used in forward(), so it is intentionally omitted.
    B, nvars, d_model, n_window, n_heads = 2, 4, 32, 8, 4
    key = jax.random.PRNGKey(0)
    kx, kp = jax.random.split(key)
    x = jax.random.normal(kx, (B, nvars, d_model, n_window), jnp.float32)
    params = init_params(kp, d_model, n_heads)

    out = window_classification(x, params, n_heads)
    out = jax.block_until_ready(out)
    assert out.shape == (B,), out.shape

    ref = reference(np.asarray(x), {k: np.asarray(v) for k, v in params.items()},
                    n_heads)
    np.testing.assert_allclose(np.asarray(out), ref.astype(np.float32),
                               rtol=2e-3, atol=2e-3)
    print("KERNEL_OK")
</pallas_src>

<mosaic_0001>
module attributes {stable_mosaic.version = 11 : i64} {
  func.func @_window_cls_kernel(%arg0: i32, %arg1: memref<2x4x8x32xf32, #tpu.memory_space<vmem>>, %arg2: memref<16x32xf32, #tpu.memory_space<vmem>>, %arg3: memref<16x4xf32, #tpu.memory_space<vmem>>, %arg4: memref<32x128xf32, #tpu.memory_space<vmem>>, %arg5: memref<1x32xf32, #tpu.memory_space<vmem>>, %arg6: memref<1x32xf32, #tpu.memory_space<vmem>>, %arg7: memref<1x32xf32, #tpu.memory_space<vmem>>, %arg8: memref<1x32xf32, #tpu.memory_space<vmem>>, %arg9: memref<1x1xf32, #tpu.memory_space<vmem>>, %arg10: memref<1x2xf32, #tpu.memory_space<vmem>>) attributes {dimension_semantics = [#tpu.dimension_semantics<parallel>], iteration_bounds = array<i64: 1>, scalar_prefetch = 0 : i64, scratch_operands = 0 : i64, tpu.core_type = #tpu.core_type<tc>, window_params = [{transform_indices = @transform_0, window_bounds = array<i64: 2, 4, 8, 32>}, {pipeline_mode = #tpu.pipeline_mode<synchronous>, transform_indices = @transform_1, window_bounds = array<i64: 16, 32>}, {pipeline_mode = #tpu.pipeline_mode<synchronous>, transform_indices = @transform_2, window_bounds = array<i64: 16, 4>}, {pipeline_mode = #tpu.pipeline_mode<synchronous>, transform_indices = @transform_3, window_bounds = array<i64: 32, 128>}, {pipeline_mode = #tpu.pipeline_mode<synchronous>, transform_indices = @transform_4, window_bounds = array<i64: 1, 32>}, {pipeline_mode = #tpu.pipeline_mode<synchronous>, transform_indices = @transform_5, window_bounds = array<i64: 1, 32>}, {pipeline_mode = #tpu.pipeline_mode<synchronous>, transform_indices = @transform_6, window_bounds = array<i64: 1, 32>}, {pipeline_mode = #tpu.pipeline_mode<synchronous>, transform_indices = @transform_7, window_bounds = array<i64: 1, 32>}, {pipeline_mode = #tpu.pipeline_mode<synchronous>, transform_indices = @transform_8, window_bounds = array<i64: 1, 1>}, {transform_indices = @transform_9, window_bounds = array<i64: 1, 2>}]} {
    %c0 = arith.constant 0 : index
    %c0_0 = arith.constant 0 : index
    %c0_1 = arith.constant 0 : index
    %c0_2 = arith.constant 0 : index
    %0 = vector.load %arg1[%c0, %c0_0, %c0_1, %c0_2] : memref<2x4x8x32xf32, #tpu.memory_space<vmem>>, vector<2x4x8x32xf32>
    %cst = arith.constant dense<0.000000e+00> : vector<2x8x32xf32>
    %1 = vector.multi_reduction <add>, %0, %cst [1] : vector<2x4x8x32xf32> to vector<2x8x32xf32>
    %cst_3 = arith.constant 4.000000e+00 : f32
    %2 = vector.broadcast %cst_3 : f32 to vector<2x8x32xf32>
    %3 = arith.divf %1, %2 : vector<2x8x32xf32>
    %4 = vector.shape_cast %3 : vector<2x8x32xf32> to vector<16x32xf32>
    %c0_4 = arith.constant 0 : index
    %c0_5 = arith.constant 0 : index
    %5 = vector.load %arg2[%c0_4, %c0_5] : memref<16x32xf32, #tpu.memory_space<vmem>>, vector<16x32xf32>
    %cst_6 = arith.constant dense<0.000000e+00> : vector<16x16xf32>
    %6 = tpu.matmul %4, %5, %cst_6 {dimension_numbers = #tpu.dot_dimension_numbers<[1], [1], [0], [0], [0, 0, 1, 0], [], []>, precision = #tpu.contract_precision<fp32>} : vector<16x32xf32>, vector<16x32xf32>, vector<16x16xf32> -> vector<16x16xf32>
    %7 = vector.shape_cast %6 : vector<16x16xf32> to vector<2x8x16xf32>
    %cst_7 = arith.constant dense<0xFF800000> : vector<2x16xf32>
    %8 = vector.multi_reduction <maximumf>, %7, %cst_7 [1] : vector<2x8x16xf32> to vector<2x16xf32>
    %9 = vector.shape_cast %8 : vector<2x16xf32> to vector<2x1x16xf32>
    %10 = vector.broadcast %9 : vector<2x1x16xf32> to vector<2x8x16xf32>
    %11 = arith.subf %7, %10 : vector<2x8x16xf32>
    %12 = math.exp %11 : vector<2x8x16xf32>
    %cst_8 = arith.constant dense<0.000000e+00> : vector<2x16xf32>
    %13 = vector.multi_reduction <add>, %12, %cst_8 [1] : vector<2x8x16xf32> to vector<2x16xf32>
    %14 = vector.shape_cast %13 : vector<2x16xf32> to vector<2x1x16xf32>
    %15 = vector.broadcast %14 : vector<2x1x16xf32> to vector<2x8x16xf32>
    %16 = arith.divf %12, %15 : vector<2x8x16xf32>
    %17 = vector.shape_cast %16 : vector<2x8x16xf32> to vector<16x16xf32>
    %c0_9 = arith.constant 0 : index
    %c0_10 = arith.constant 0 : index
    %18 = vector.load %arg3[%c0_9, %c0_10] : memref<16x4xf32, #tpu.memory_space<vmem>>, vector<16x4xf32>
    %cst_11 = arith.constant dense<0.000000e+00> : vector<16x4xf32>
    %19 = tpu.matmul %17, %18, %cst_11 {dimension_numbers = #tpu.dot_dimension_numbers<[1], [0], [0], [1], [0, 0, 1, 1], [], []>, precision = #tpu.contract_precision<fp32>} : vector<16x16xf32>, vector<16x4xf32>, vector<16x4xf32> -> vector<16x4xf32>
    %20 = vector.shape_cast %19 : vector<16x4xf32> to vector<2x8x4xf32>
    %21 = vector.extract_strided_slice %20 {offsets = [0, 0, 0], sizes = [2, 8, 1], strides = [1, 1, 1]} : vector<2x8x4xf32> to vector<2x8x1xf32>
    %22 = vector.broadcast %21 : vector<2x8x1xf32> to vector<2x8x32xf32>
    %23 = arith.mulf %22, %3 : vector<2x8x32xf32>
    %cst_12 = arith.constant dense<0.000000e+00> : vector<2x32xf32>
    %24 = vector.multi_reduction <add>, %23, %cst_12 [1] : vector<2x8x32xf32> to vector<2x32xf32>
    %25 = vector.extract_strided_slice %20 {offsets = [0, 0, 1], sizes = [2, 8, 1], strides = [1, 1, 1]} : vector<2x8x4xf32> to vector<2x8x1xf32>
    %26 = vector.broadcast %25 : vector<2x8x1xf32> to vector<2x8x32xf32>
    %27 = arith.mulf %26, %3 : vector<2x8x32xf32>
    %cst_13 = arith.constant dense<0.000000e+00> : vector<2x32xf32>
    %28 = vector.multi_reduction <add>, %27, %cst_13 [1] : vector<2x8x32xf32> to vector<2x32xf32>
    %29 = vector.extract_strided_slice %20 {offsets = [0, 0, 2], sizes = [2, 8, 1], strides = [1, 1, 1]} : vector<2x8x4xf32> to vector<2x8x1xf32>
    %30 = vector.broadcast %29 : vector<2x8x1xf32> to vector<2x8x32xf32>
    %31 = arith.mulf %30, %3 : vector<2x8x32xf32>
    %cst_14 = arith.constant dense<0.000000e+00> : vector<2x32xf32>
    %32 = vector.multi_reduction <add>, %31, %cst_14 [1] : vector<2x8x32xf32> to vector<2x32xf32>
    %33 = vector.extract_strided_slice %20 {offsets = [0, 0, 3], sizes = [2, 8, 1], strides = [1, 1, 1]} : vector<2x8x4xf32> to vector<2x8x1xf32>
    %34 = vector.broadcast %33 : vector<2x8x1xf32> to vector<2x8x32xf32>
    %35 = arith.mulf %34, %3 : vector<2x8x32xf32>
    %cst_15 = arith.constant dense<0.000000e+00> : vector<2x32xf32>
    %36 = vector.multi_reduction <add>, %35, %cst_15 [1] : vector<2x8x32xf32> to vector<2x32xf32>
    %37 = tpu.concatenate %24, %28, %32, %36 in 1 : vector<2x32xf32>, vector<2x32xf32>, vector<2x32xf32>, vector<2x32xf32> -> vector<2x128xf32>
    %c0_16 = arith.constant 0 : index
    %c0_17 = arith.constant 0 : index
    %38 = vector.load %arg4[%c0_16, %c0_17] : memref<32x128xf32, #tpu.memory_space<vmem>>, vector<32x128xf32>
    %cst_18 = arith.constant dense<0.000000e+00> : vector<2x32xf32>
    %39 = tpu.matmul %37, %38, %cst_18 {dimension_numbers = #tpu.dot_dimension_numbers<[1], [1], [0], [0], [0, 0, 1, 0], [], []>, precision = #tpu.contract_precision<fp32>} : vector<2x128xf32>, vector<32x128xf32>, vector<2x32xf32> -> vector<2x32xf32>
    %c0_19 = arith.constant 0 : index
    %c0_20 = arith.constant 0 : index
    %40 = vector.load %arg5[%c0_19, %c0_20] : memref<1x32xf32, #tpu.memory_space<vmem>>, vector<1x32xf32>
    %41 = vector.broadcast %40 : vector<1x32xf32> to vector<2x32xf32>
    %42 = arith.addf %39, %41 : vector<2x32xf32>
    %cst_21 = arith.constant dense<0.000000e+00> : vector<2xf32>
    %43 = vector.multi_reduction <add>, %42, %cst_21 [1] : vector<2x32xf32> to vector<2xf32>
    %44 = vector.shape_cast %43 : vector<2xf32> to vector<2x1xf32>
    %cst_22 = arith.constant 3.200000e+01 : f32
    %45 = vector.broadcast %cst_22 : f32 to vector<2x1xf32>
    %46 = arith.divf %44, %45 : vector<2x1xf32>
    %47 = vector.broadcast %46 : vector<2x1xf32> to vector<2x32xf32>
    %48 = arith.subf %42, %47 : vector<2x32xf32>
    %49 = arith.mulf %48, %48 : vector<2x32xf32>
    %cst_23 = arith.constant dense<0.000000e+00> : vector<2xf32>
    %50 = vector.multi_reduction <add>, %49, %cst_23 [1] : vector<2x32xf32> to vector<2xf32>
    %51 = vector.shape_cast %50 : vector<2xf32> to vector<2x1xf32>
    %cst_24 = arith.constant 3.200000e+01 : f32
    %52 = vector.broadcast %cst_24 : f32 to vector<2x1xf32>
    %53 = arith.divf %51, %52 : vector<2x1xf32>
    %54 = vector.broadcast %46 : vector<2x1xf32> to vector<2x32xf32>
    %55 = arith.subf %42, %54 : vector<2x32xf32>
    %cst_25 = arith.constant 9.99999974E-6 : f32
    %56 = vector.broadcast %cst_25 : f32 to vector<2x1xf32>
    %57 = arith.addf %53, %56 : vector<2x1xf32>
    %58 = math.rsqrt %57 : vector<2x1xf32>
    %59 = vector.broadcast %58 : vector<2x1xf32> to vector<2x32xf32>
    %60 = arith.mulf %55, %59 : vector<2x32xf32>
    %c0_26 = arith.constant 0 : index
    %c0_27 = arith.constant 0 : index
    %61 = vector.load %arg6[%c0_26, %c0_27] : memref<1x32xf32, #tpu.memory_space<vmem>>, vector<1x32xf32>
    %62 = vector.broadcast %61 : vector<1x32xf32> to vector<2x32xf32>
    %63 = arith.mulf %60, %62 : vector<2x32xf32>
    %c0_28 = arith.constant 0 : index
    %c0_29 = arith.constant 0 : index
    %64 = vector.load %arg7[%c0_28, %c0_29] : memref<1x32xf32, #tpu.memory_space<vmem>>, vector<1x32xf32>
    %65 = vector.broadcast %64 : vector<1x32xf32> to vector<2x32xf32>
    %66 = arith.addf %63, %65 : vector<2x32xf32>
    %c0_30 = arith.constant 0 : index
    %c0_31 = arith.constant 0 : index
    %67 = vector.load %arg8[%c0_30, %c0_31] : memref<1x32xf32, #tpu.memory_space<vmem>>, vector<1x32xf32>
    %cst_32 = arith.constant dense<0.000000e+00> : vector<1x2xf32>
    %68 = tpu.matmul %67, %66, %cst_32 {dimension_numbers = #tpu.dot_dimension_numbers<[1], [1], [0], [0], [0, 0, 1, 0], [], []>, precision = #tpu.contract_precision<fp32>} : vector<1x32xf32>, vector<2x32xf32>, vector<1x2xf32> -> vector<1x2xf32>
    %c0_33 = arith.constant 0 : index
    %c0_34 = arith.constant 0 : index
    %69 = vector.load %arg9[%c0_33, %c0_34] : memref<1x1xf32, #tpu.memory_space<vmem>>, vector<1x1xf32>
    %70 = vector.broadcast %69 : vector<1x1xf32> to vector<1x2xf32>
    %71 = arith.addf %68, %70 : vector<1x2xf32>
    %c0_35 = arith.constant 0 : index
    %c0_36 = arith.constant 0 : index
    %72 = vector.load %arg10[%c0_35, %c0_36] : memref<1x2xf32, #tpu.memory_space<vmem>>, vector<1x2xf32>
    tpu.vector_store %arg10[%c0_35, %c0_36], %71 {strides = array<i32>} : memref<1x2xf32, #tpu.memory_space<vmem>>, vector<1x2xf32>,
    return
  }
  func.func @transform_0(%arg0: i32) -> (i32, i32, i32, i32) {
    %c0_i32 = arith.constant 0 : i32
    %c0_i32_0 = arith.constant 0 : i32
    %c0_i32_1 = arith.constant 0 : i32
    %c0_i32_2 = arith.constant 0 : i32
    return %arg0, %c0_i32, %c0_i32_0, %c0_i32_1 : i32, i32, i32, i32
  }
  func.func @transform_1(%arg0: i32) -> (i32, i32) {
    %c0_i32 = arith.constant 0 : i32
    %c0_i32_0 = arith.constant 0 : i32
    %c0_i32_1 = arith.constant 0 : i32
    return %c0_i32, %c0_i32_0 : i32, i32
  }
  func.func @transform_2(%arg0: i32) -> (i32, i32) {
    %c0_i32 = arith.constant 0 : i32
    %c0_i32_0 = arith.constant 0 : i32
    %c0_i32_1 = arith.constant 0 : i32
    return %c0_i32, %c0_i32_0 : i32, i32
  }
  func.func @transform_3(%arg0: i32) -> (i32, i32) {
    %c0_i32 = arith.constant 0 : i32
    %c0_i32_0 = arith.constant 0 : i32
    %c0_i32_1 = arith.constant 0 : i32
    return %c0_i32, %c0_i32_0 : i32, i32
  }
  func.func @transform_4(%arg0: i32) -> (i32, i32) {
    %c0_i32 = arith.constant 0 : i32
    %c0_i32_0 = arith.constant 0 : i32
    %c0_i32_1 = arith.constant 0 : i32
    return %c0_i32, %c0_i32_0 : i32, i32
  }
  func.func @transform_5(%arg0: i32) -> (i32, i32) {
    %c0_i32 = arith.constant 0 : i32
    %c0_i32_0 = arith.constant 0 : i32
    %c0_i32_1 = arith.constant 0 : i32
    return %c0_i32, %c0_i32_0 : i32, i32
  }
  func.func @transform_6(%arg0: i32) -> (i32, i32) {
    %c0_i32 = arith.constant 0 : i32
    %c0_i32_0 = arith.constant 0 : i32
    %c0_i32_1 = arith.constant 0 : i32
    return %c0_i32, %c0_i32_0 : i32, i32
  }
  func.func @transform_7(%arg0: i32) -> (i32, i32) {
    %c0_i32 = arith.constant 0 : i32
    %c0_i32_0 = arith.constant 0 : i32
    %c0_i32_1 = arith.constant 0 : i32
    return %c0_i32, %c0_i32_0 : i32, i32
  }
  func.func @transform_8(%arg0: i32) -> (i32, i32) {
    %c0_i32 = arith.constant 0 : i32
    %c0_i32_0 = arith.constant 0 : i32
    %c0_i32_1 = arith.constant 0 : i32
    return %c0_i32, %c0_i32_0 : i32, i32
  }
  func.func @transform_9(%arg0: i32) -> (i32, i32) {
    %c0_i32 = arith.constant 0 : i32
    %c0_i32_0 = arith.constant 0 : i32
    return %arg0, %c0_i32 : i32, i32
  }
}

</mosaic_0001>

<llo_original>
// kernel: tpu_custom_call.1
$region0: #{tpu_custom_call.1}
  #allocation0 [shape = 'u32[]', space=smem, size = 0x4, offset = 0x4, fixed_abs, tag = 'smem constant byte address 0x4 - core index']
  #allocation1 [shape = 'u32[144,128]{1,0:T(1,128)}', space=vmem, size = 0x12000, scoped, tag = 'internal scratch']
  #allocation2 [shape = 'f32[1,1]{1,0:T(1,128)S(1)}', space=vmem, size = 0x200, scoped, tag = 'scoped memory for tpu_custom_call.1']
  %s0 = inlined_call_operand.hbm [shape: f32[2,4,8,32], index: 0, kind: input, shape index: {}]
  %s1 = inlined_call_operand.vmem [shape: f32[16,32], index: 1, kind: input, shape index: {}]
  %s2 = inlined_call_operand.vmem [shape: f32[16,4], index: 2, kind: input, shape index: {}]
  %s3 = inlined_call_operand.hbm [shape: f32[32,128], index: 3, kind: input, shape index: {}]
  %s4 = inlined_call_operand.vmem [shape: f32[1,32], index: 4, kind: input, shape index: {}]
  %s5 = inlined_call_operand.vmem [shape: f32[1,32], index: 5, kind: input, shape index: {}]
  %s6 = inlined_call_operand.vmem [shape: f32[1,32], index: 6, kind: input, shape index: {}]
  %s7 = inlined_call_operand.vmem [shape: f32[1,32], index: 7, kind: input, shape index: {}]
  %s8 = inlined_call_operand.<no memory space> [shape: f32[1,1], index: 8, kind: input, shape index: {}]
  %s9 = inlined_call_operand.hbm [shape: f32[1,2], index: 9, kind: output, shape index: {}]
  %s10 = sld [smem:[#allocation0]]
  $region54: #{tpu_custom_call.1} parent=0
    _
  %s12 = ssub.s32 1, %s10
  %s13 = scalar_select 0, %s12, %s10
  %v14 = vstv %s8
  %15 = vst [vmem:[#allocation2] sm:$0x1] %v14
  $region1: #{tpu_custom_call.1} parent=0
    #allocation3 [shape = 'u8[32768]{0}', space=vmem, size = 0x8000, scoped, tag = 'input window, operand 0, single buffered']
    #allocation4 [shape = 's32[1]{0}', space=sflag, size = 0x4, scoped, tag = 'scoped memory for tpu_custom_call.1']
    #allocation5 [shape = 's32[1]{0}', space=sflag, size = 0x4, scoped, tag = 'scoped memory for tpu_custom_call.1']
    #allocation6 [shape = 'u8[16384]{0}', space=vmem, size = 0x4000, scoped, tag = 'input window, operand 3, single buffered']
    #allocation7 [shape = 's32[1]{0}', space=sflag, size = 0x4, scoped, tag = 'scoped memory for tpu_custom_call.1']
    #allocation8 [shape = 'u8[512]{0}', space=vmem, size = 0x400, scoped, tag = 'output window, operand 0, single buffered']
    %16 = vsyncpa [#allocation4], 0
    %17 = vsyncpa [#allocation7], 0
    %18 = vsyncpa [#allocation5], 0
    // Predicated region
    $region2: #{tpu_custom_call.1} parent=1 // pred_check
      _
    $region3: #{tpu_custom_call.1} parent=1 // pred_check_branch
      %20 = sbr.rel (0) target = $region5
    $region4: #{tpu_custom_call.1} parent=1 // pred_region
      %s22 = ssub.s32 1024, 1024
      %23 = vsyncadd [#allocation4], %s22
      %s24 = sshll.u32 [#allocation3], 4
      %s25 = int_to_ptr.vmem [resolvable:$true] %s24
      %30 = dma.hbm_to_vmem [thread:$0]  %s0, 1024, %s25, [#allocation4], 128, 128, 8
    $region5: #{tpu_custom_call.1} parent=1 // pred_fallthru
      _
    // Predicated region
    $region6: #{tpu_custom_call.1} parent=1 // pred_check
      _
    $region7: #{tpu_custom_call.1} parent=1 // pred_check_branch
      %32 = sbr.rel (0) target = $region9
    $region8: #{tpu_custom_call.1} parent=1 // pred_region
      _
    $region9: #{tpu_custom_call.1} parent=1 // pred_fallthru
      _
    // Predicated region
    $region10: #{tpu_custom_call.1} parent=1 // pred_check
      _
    $region11: #{tpu_custom_call.1} parent=1 // pred_check_branch
      %34 = sbr.rel (0) target = $region13
    $region12: #{tpu_custom_call.1} parent=1 // pred_region
      _
    $region13: #{tpu_custom_call.1} parent=1 // pred_fallthru
      _
    // Predicated region
    $region14: #{tpu_custom_call.1} parent=1 // pred_check
      _
    $region15: #{tpu_custom_call.1} parent=1 // pred_check_branch
      %36 = sbr.rel (0) target = $region17
    $region16: #{tpu_custom_call.1} parent=1 // pred_region
      %s38 = ssub.s32 512, 512
      %39 = vsyncadd [#allocation7], %s38
      %s40 = sshll.u32 [#allocation6], 4
      %s41 = int_to_ptr.vmem [resolvable:$true] %s40
      %46 = dma.hbm_to_vmem [thread:$0]  %s3, 512, %s41, [#allocation7], 128, 128, 8
    $region17: #{tpu_custom_call.1} parent=1 // pred_fallthru
      _
    // Predicated region
    $region18: #{tpu_custom_call.1} parent=1 // pred_check
      _
    $region19: #{tpu_custom_call.1} parent=1 // pred_check_branch
      %48 = sbr.rel (0) target = $region21
    $region20: #{tpu_custom_call.1} parent=1 // pred_region
      _
    $region21: #{tpu_custom_call.1} parent=1 // pred_fallthru
      _
    // Predicated region
    $region22: #{tpu_custom_call.1} parent=1 // pred_check
      _
    $region23: #{tpu_custom_call.1} parent=1 // pred_check_branch
      %50 = sbr.rel (0) target = $region25
    $region24: #{tpu_custom_call.1} parent=1 // pred_region
      _
    $region25: #{tpu_custom_call.1} parent=1 // pred_fallthru
      _
    // Predicated region
    $region26: #{tpu_custom_call.1} parent=1 // pred_check
      _
    $region27: #{tpu_custom_call.1} parent=1 // pred_check_branch
      %52 = sbr.rel (0) target = $region29
    $region28: #{tpu_custom_call.1} parent=1 // pred_region
      _
    $region29: #{tpu_custom_call.1} parent=1 // pred_fallthru
      _
    // Predicated region
    $region30: #{tpu_custom_call.1} parent=1 // pred_check
      _
    $region31: #{tpu_custom_call.1} parent=1 // pred_check_branch
      %54 = sbr.rel (0) target = $region33
    $region32: #{tpu_custom_call.1} parent=1 // pred_region
      _
    $region33: #{tpu_custom_call.1} parent=1 // pred_fallthru
      _
    // Predicated region
    $region34: #{tpu_custom_call.1} parent=1 // pred_check
      _
    $region35: #{tpu_custom_call.1} parent=1 // pred_check_branch
      %56 = sbr.rel (0) target = $region37
    $region36: #{tpu_custom_call.1} parent=1 // pred_region
      _
    $region37: #{tpu_custom_call.1} parent=1 // pred_fallthru
      _
    // Predicated region
    $region38: #{tpu_custom_call.1} parent=1 // pred_check
      _
    $region39: #{tpu_custom_call.1} parent=1 // pred_check_branch
      %58 = sbr.rel (0) target = $region41
    $region40: #{tpu_custom_call.1} parent=1 // pred_region
      %59 = dma.done [#allocation4], 1024
    $region41: #{tpu_custom_call.1} parent=1 // pred_fallthru
      _
    // Predicated region
    $region42: #{tpu_custom_call.1} parent=1 // pred_check
      _
    $region43: #{tpu_custom_call.1} parent=1 // pred_check_branch
      %61 = sbr.rel (0) target = $region45
    $region44: #{tpu_custom_call.1} parent=1 // pred_region
      %62 = dma.done [#allocation7], 512
    $region45: #{tpu_custom_call.1} parent=1 // pred_fallthru
      _
    %v63 = vld [vmem:[#allocation3] sm:$0xff]
    %v64 = vld [vmem:[#allocation3 + $0x8] sm:$0xff]
    %v65 = vld [vmem:[#allocation3 + $0x10] sm:$0xff]
    %v66 = vld [vmem:[#allocation3 + $0x18] sm:$0xff]
    %v67 = vld [vmem:[#allocation3 + $0x20] sm:$0xff]
    %v68 = vld [vmem:[#allocation3 + $0x28] sm:$0xff]
    %v69 = vld [vmem:[#allocation3 + $0x30] sm:$0xff]
    %v70 = vld [vmem:[#allocation3 + $0x38] sm:$0xff]
    %vm71 = vcmask 261120
    %v72 = vsel %vm71, %v63, 0.0
    %v73 = vsel %vm71, %v64, 0.0
    %v74 = vadd.f32 %v72, %v73
    %v75 = vsel %vm71, %v65, 0.0
    %v76 = vadd.f32 %v74, %v75
    %v77 = vsel %vm71, %v66, 0.0
    %v78 = vadd.f32 %v76, %v77
    %v79 = vsel %vm71, %v67, 0.0
    %v80 = vsel %vm71, %v68, 0.0
    %v81 = vadd.f32 %v79, %v80
    %v82 = vsel %vm71, %v69, 0.0
    %v83 = vadd.f32 %v81, %v82
    %v84 = vsel %vm71, %v70, 0.0
    %v85 = vadd.f32 %v83, %v84
    %v86 = vrcp.pop 4.0
    %v87 = vmul.f32 %v78, %v86
    %v88 = vmul.f32 %v85, %v86
    %v89 = vld [vmem:[%s1] sm:$0xff]
    %v90 = vld [vmem:[%s1 + $0x8] sm:$0xff]
    %v92 = vsel %vm71, %v87, 0
    %v95 = vsel %vm71, %v88, 0
    %v98 = vsel %vm71, %v89, 0
    %v101 = vsel %vm71, %v90, 0
    %103 = vmatprep.subr.mxu0 0.0
    %104 = vmatpush1.xpose.msra.mxu0 0.0
    %105 = vmatprep.subr.mxu0 0.0
    %106 = vmatpush1.xpose.msra.mxu0 0.0
    %107 = vmatprep.subr.mxu0 0.0
    %108 = vmatpush1.xpose.msra.mxu0 0.0
    %109 = vmatprep.subr.mxu0 0.0
    %110 = vmatpush1.xpose.msra.mxu0 0.0
    %111 = vmatprep.subr.mxu0 0.0
    %112 = vmatpush1.xpose.msra.mxu0 0.0
    %113 = vmatprep.subr.mxu0 0.0
    %114 = vmatpush1.xpose.msra.mxu0 0.0
    %115 = vmatprep.subr.mxu0 0.0
    %116 = vmatpush1.xpose.msra.mxu0 0.0
    %117 = vmatprep.subr.mxu0 0.0
    %118 = vmatpush1.xpose.msra.mxu0 0.0
    %119 = vmatprep.subr.mxu0 0.0
    %120 = vmatpush1.xpose.msra.mxu0 0.0
    %121 = vmatprep.subr.mxu0 0.0
    %122 = vmatpush1.xpose.msra.mxu0 0.0
    %123 = vmatprep.subr.mxu0 0.0
    %124 = vmatpush1.xpose.msra.mxu0 0.0
    %125 = vmatprep.subr.mxu0 0.0
    %126 = vmatpush1.xpose.msra.mxu0 0.0
    %127 = vmatprep.subr.mxu0 0.0
    %128 = vmatpush1.xpose.msra.mxu0 0.0
    %129 = vmatprep.subr.mxu0 0.0
    %130 = vmatpush1.xpose.msra.mxu0 0.0
    %131 = vmatprep.subr.mxu0 0.0
    %v132 = vand.u32 %v101, 4294901760
    %133 = vmatpush1.xpose.msra.mxu0 %v132
    %134 = vmatprep.subr.mxu0 0.0
    %v135 = vand.u32 %v98, 4294901760
    %136 = vmatpush1.xpose.msra.mxu0 %v135
    %137 = vmatprep.subr.mxu0 0.0
    %138 = vmatpush2.xpose.msra.mxu0 0.0
    %139 = vmatprep.subr.mxu0 0.0
    %140 = vmatpush2.xpose.msra.mxu0 0.0
    %141 = vmatprep.subr.mxu0 0.0
    %142 = vmatpush2.xpose.msra.mxu0 0.0
    %143 = vmatprep.subr.mxu0 0.0
    %144 = vmatpush2.xpose.msra.mxu0 0.0
    %145 = vmatprep.subr.mxu0 0.0
    %146 = vmatpush2.xpose.msra.mxu0 0.0
    %147 = vmatprep.subr.mxu0 0.0
    %148 = vmatpush2.xpose.msra.mxu0 0.0
    %149 = vmatprep.subr.mxu0 0.0
    %150 = vmatpush2.xpose.msra.mxu0 0.0
    %151 = vmatprep.subr.mxu0 0.0
    %152 = vmatpush2.xpose.msra.mxu0 0.0
    %153 = vmatprep.subr.mxu0 0.0
    %154 = vmatpush2.xpose.msra.mxu0 0.0
    %155 = vmatprep.subr.mxu0 0.0
    %156 = vmatpush2.xpose.msra.mxu0 0.0
    %157 = vmatprep.subr.mxu0 0.0
    %158 = vmatpush2.xpose.msra.mxu0 0.0
    %159 = vmatprep.subr.mxu0 0.0
    %160 = vmatpush2.xpose.msra.mxu0 0.0
    %161 = vmatprep.subr.mxu0 0.0
    %162 = vmatpush2.xpose.msra.mxu0 0.0
    %163 = vmatprep.subr.mxu0 0.0
    %164 = vmatpush2.xpose.msra.mxu0 0.0
    %165 = vmatprep.subr.mxu0 0.0
    %166 = vmatpush2.xpose.msra.mxu0 0.0
    %167 = vmatprep.subr.mxu0 0.0
    %168 = vmatpush2.xpose.msra.mxu0 0.0
    %169 = vmatprep.mubr.f32.mxu0 0.0
    %v170 = vand.u32 %v92, 4294901760
    %v171 = vsub.f32 %v92, %v170
    %v172 = vand.u32 %v171, 4294901760
    %v173 = vsub.f32 %v171, %v172
    %v174 = vand.u32 %v173, 4294901760
    %175 = vmatmul.mubr.f32.gmra.mxu0 %v174
    %v176 = vpop.f32.mrf.mxu0
    %v177 = vadd.f32 0.0, %v176
    %v178 = vpop.f32.mrf.mxu0
    %179 = vmatprep.mubr.f32.mxu0 0.0
    %v180 = vand.u32 %v95, 4294901760
    %v181 = vsub.f32 %v95, %v180
    %v182 = vand.u32 %v181, 4294901760
    %v183 = vsub.f32 %v181, %v182
    %v184 = vand.u32 %v183, 4294901760
    %185 = vmatmul.mubr.f32.gmra.mxu0 %v184
    %v186 = vpop.f32.mrf.mxu0
    %v187 = vadd.f32 0.0, %v186
    %v188 = vpop.f32.mrf.mxu0
    %189 = vdwg.mxu0
    %190 = vmatprep.subr.mxu0 0.0
    %191 = vmatpush1.xpose.msra.mxu0 0.0
    %192 = vmatprep.subr.mxu0 0.0
    %193 = vmatpush1.xpose.msra.mxu0 0.0
    %194 = vmatprep.subr.mxu0 0.0
    %195 = vmatpush1.xpose.msra.mxu0 0.0
    %196 = vmatprep.subr.mxu0 0.0
    %197 = vmatpush1.xpose.msra.mxu0 0.0
    %198 = vmatprep.subr.mxu0 0.0
    %199 = vmatpush1.xpose.msra.mxu0 0.0
    %200 = vmatprep.subr.mxu0 0.0
    %201 = vmatpush1.xpose.msra.mxu0 0.0
    %202 = vmatprep.subr.mxu0 0.0
    %203 = vmatpush1.xpose.msra.mxu0 0.0
    %204 = vmatprep.subr.mxu0 0.0
    %205 = vmatpush1.xpose.msra.mxu0 0.0
    %206 = vmatprep.subr.mxu0 0.0
    %207 = vmatpush1.xpose.msra.mxu0 0.0
    %208 = vmatprep.subr.mxu0 0.0
    %209 = vmatpush1.xpose.msra.mxu0 0.0
    %210 = vmatprep.subr.mxu0 0.0
    %211 = vmatpush1.xpose.msra.mxu0 0.0
    %212 = vmatprep.subr.mxu0 0.0
    %213 = vmatpush1.xpose.msra.mxu0 0.0
    %214 = vmatprep.subr.mxu0 0.0
    %215 = vmatpush1.xpose.msra.mxu0 0.0
    %216 = vmatprep.subr.mxu0 0.0
    %217 = vmatpush1.xpose.msra.mxu0 0.0
    %218 = vmatprep.subr.mxu0 0.0
    %v219 = vand.u32 %v101, 4294901760
    %v220 = vsub.f32 %v101, %v219
    %v221 = vand.u32 %v220, 4294901760
    %v222 = vsub.f32 %v220, %v221
    %v223 = vand.u32 %v222, 4294901760
    %224 = vmatpush1.xpose.msra.mxu0 %v223
    %225 = vmatprep.subr.mxu0 0.0
    %v226 = vand.u32 %v98, 4294901760
    %v227 = vsub.f32 %v98, %v226
    %v228 = vand.u32 %v227, 4294901760
    %v229 = vsub.f32 %v227, %v228
    %v230 = vand.u32 %v229, 4294901760
    %231 = vmatpush1.xpose.msra.mxu0 %v230
    %232 = vmatprep.subr.mxu0 0.0
    %233 = vmatpush2.xpose.msra.mxu0 0.0
    %234 = vmatprep.subr.mxu0 0.0
    %235 = vmatpush2.xpose.msra.mxu0 0.0
    %236 = vmatprep.subr.mxu0 0.0
    %237 = vmatpush2.xpose.msra.mxu0 0.0
    %238 = vmatprep.subr.mxu0 0.0
    %239 = vmatpush2.xpose.msra.mxu0 0.0
    %240 = vmatprep.subr.mxu0 0.0
    %241 = vmatpush2.xpose.msra.mxu0 0.0
    %242 = vmatprep.subr.mxu0 0.0
    %243 = vmatpush2.xpose.msra.mxu0 0.0
    %244 = vmatprep.subr.mxu0 0.0
    %245 = vmatpush2.xpose.msra.mxu0 0.0
    %246 = vmatprep.subr.mxu0 0.0
    %247 = vmatpush2.xpose.msra.mxu0 0.0
    %248 = vmatprep.subr.mxu0 0.0
    %249 = vmatpush2.xpose.msra.mxu0 0.0
    %250 = vmatprep.subr.mxu0 0.0
    %251 = vmatpush2.xpose.msra.mxu0 0.0
    %252 = vmatprep.subr.mxu0 0.0
    %253 = vmatpush2.xpose.msra.mxu0 0.0
    %254 = vmatprep.subr.mxu0 0.0
    %255 = vmatpush2.xpose.msra.mxu0 0.0
    %256 = vmatprep.subr.mxu0 0.0
    %257 = vmatpush2.xpose.msra.mxu0 0.0
    %258 = vmatprep.subr.mxu0 0.0
    %259 = vmatpush2.xpose.msra.mxu0 0.0
    %260 = vmatprep.subr.mxu0 0.0
    %261 = vmatpush2.xpose.msra.mxu0 0.0
    %262 = vmatprep.subr.mxu0 0.0
    %263 = vmatpush2.xpose.msra.mxu0 0.0
    %264 = vmatprep.mubr.f32.mxu0 0.0
    %v265 = vand.u32 %v92, 4294901760
    %266 = vmatmul.mubr.f32.gmra.mxu0 %v265
    %v267 = vpop.f32.mrf.mxu0
    %v268 = vadd.f32 %v177, %v267
    %v269 = vpop.f32.mrf.mxu0
    %270 = vmatprep.mubr.f32.mxu0 0.0
    %v271 = vand.u32 %v95, 4294901760
    %272 = vmatmul.mubr.f32.gmra.mxu0 %v271
    %v273 = vpop.f32.mrf.mxu0
    %v274 = vadd.f32 %v187, %v273
    %v275 = vpop.f32.mrf.mxu0
    %276 = vdwg.mxu0
    %277 = vmatprep.subr.mxu0 0.0
    %278 = vmatpush1.xpose.msra.mxu0 0.0
    %279 = vmatprep.subr.mxu0 0.0
    %280 = vmatpush1.xpose.msra.mxu0 0.0
    %281 = vmatprep.subr.mxu0 0.0
    %282 = vmatpush1.xpose.msra.mxu0 0.0
    %283 = vmatprep.subr.mxu0 0.0
    %284 = vmatpush1.xpose.msra.mxu0 0.0
    %285 = vmatprep.subr.mxu0 0.0
    %286 = vmatpush1.xpose.msra.mxu0 0.0
    %287 = vmatprep.subr.mxu0 0.0
    %288 = vmatpush1.xpose.msra.mxu0 0.0
    %289 = vmatprep.subr.mxu0 0.0
    %290 = vmatpush1.xpose.msra.mxu0 0.0
    %291 = vmatprep.subr.mxu0 0.0
    %292 = vmatpush1.xpose.msra.mxu0 0.0
    %293 = vmatprep.subr.mxu0 0.0
    %294 = vmatpush1.xpose.msra.mxu0 0.0
    %295 = vmatprep.subr.mxu0 0.0
    %296 = vmatpush1.xpose.msra.mxu0 0.0
    %297 = vmatprep.subr.mxu0 0.0
    %298 = vmatpush1.xpose.msra.mxu0 0.0
    %299 = vmatprep.subr.mxu0 0.0
    %300 = vmatpush1.xpose.msra.mxu0 0.0
    %301 = vmatprep.subr.mxu0 0.0
    %302 = vmatpush1.xpose.msra.mxu0 0.0
    %303 = vmatprep.subr.mxu0 0.0
    %304 = vmatpush1.xpose.msra.mxu0 0.0
    %305 = vmatprep.subr.mxu0 0.0
    %v306 = vand.u32 %v101, 4294901760
    %v307 = vsub.f32 %v101, %v306
    %308 = vmatpush1.xpose.msra.mxu0 %v307
    %309 = vmatprep.subr.mxu0 0.0
    %v310 = vand.u32 %v98, 4294901760
    %v311 = vsub.f32 %v98, %v310
    %312 = vmatpush1.xpose.msra.mxu0 %v311
    %313 = vmatprep.subr.mxu0 0.0
    %314 = vmatpush2.xpose.msra.mxu0 0.0
    %315 = vmatprep.subr.mxu0 0.0
    %316 = vmatpush2.xpose.msra.mxu0 0.0
    %317 = vmatprep.subr.mxu0 0.0
    %318 = vmatpush2.xpose.msra.mxu0 0.0
    %319 = vmatprep.subr.mxu0 0.0
    %320 = vmatpush2.xpose.msra.mxu0 0.0
    %321 = vmatprep.subr.mxu0 0.0
    %322 = vmatpush2.xpose.msra.mxu0 0.0
    %323 = vmatprep.subr.mxu0 0.0
    %324 = vmatpush2.xpose.msra.mxu0 0.0
    %325 = vmatprep.subr.mxu0 0.0
    %326 = vmatpush2.xpose.msra.mxu0 0.0
    %327 = vmatprep.subr.mxu0 0.0
    %328 = vmatpush2.xpose.msra.mxu0 0.0
    %329 = vmatprep.subr.mxu0 0.0
    %330 = vmatpush2.xpose.msra.mxu0 0.0
    %331 = vmatprep.subr.mxu0 0.0
    %332 = vmatpush2.xpose.msra.mxu0 0.0
    %333 = vmatprep.subr.mxu0 0.0
    %334 = vmatpush2.xpose.msra.mxu0 0.0
    %335 = vmatprep.subr.mxu0 0.0
    %336 = vmatpush2.xpose.msra.mxu0 0.0
    %337 = vmatprep.subr.mxu0 0.0
    %338 = vmatpush2.xpose.msra.mxu0 0.0
    %339 = vmatprep.subr.mxu0 0.0
    %340 = vmatpush2.xpose.msra.mxu0 0.0
    %341 = vmatprep.subr.mxu0 0.0
    %342 = vmatpush2.xpose.msra.mxu0 0.0
    %343 = vmatprep.subr.mxu0 0.0
    %344 = vmatpush2.xpose.msra.mxu0 0.0
    %345 = vmatprep.mubr.f32.mxu0 0.0
    %v346 = vand.u32 %v92, 4294901760
    %v347 = vsub.f32 %v92, %v346
    %348 = vmatmul.mubr.f32.gmra.mxu0 %v347
    %v349 = vpop.f32.mrf.mxu0
    %v350 = vadd.f32 %v268, %v349
    %v351 = vpop.f32.mrf.mxu0
    %352 = vmatprep.mubr.f32.mxu0 0.0
    %v353 = vand.u32 %v95, 4294901760
    %v354 = vsub.f32 %v95, %v353
    %355 = vmatmul.mubr.f32.gmra.mxu0 %v354
    %v356 = vpop.f32.mrf.mxu0
    %v357 = vadd.f32 %v274, %v356
    %v358 = vpop.f32.mrf.mxu0
    %359 = vdwg.mxu0
    %360 = vmatprep.subr.mxu0 0.0
    %361 = vmatpush1.xpose.msra.mxu0 0.0
    %362 = vmatprep.subr.mxu0 0.0
    %363 = vmatpush1.xpose.msra.mxu0 0.0
    %364 = vmatprep.subr.mxu0 0.0
    %365 = vmatpush1.xpose.msra.mxu0 0.0
    %366 = vmatprep.subr.mxu0 0.0
    %367 = vmatpush1.xpose.msra.mxu0 0.0
    %368 = vmatprep.subr.mxu0 0.0
    %369 = vmatpush1.xpose.msra.mxu0 0.0
    %370 = vmatprep.subr.mxu0 0.0
    %371 = vmatpush1.xpose.msra.mxu0 0.0
    %372 = vmatprep.subr.mxu0 0.0
    %373 = vmatpush1.xpose.msra.mxu0 0.0
    %374 = vmatprep.subr.mxu0 0.0
    %375 = vmatpush1.xpose.msra.mxu0 0.0
    %376 = vmatprep.subr.mxu0 0.0
    %377 = vmatpush1.xpose.msra.mxu0 0.0
    %378 = vmatprep.subr.mxu0 0.0
    %379 = vmatpush1.xpose.msra.mxu0 0.0
    %380 = vmatprep.subr.mxu0 0.0
    %381 = vmatpush1.xpose.msra.mxu0 0.0
    %382 = vmatprep.subr.mxu0 0.0
    %383 = vmatpush1.xpose.msra.mxu0 0.0
    %384 = vmatprep.subr.mxu0 0.0
    %385 = vmatpush1.xpose.msra.mxu0 0.0
    %386 = vmatprep.subr.mxu0 0.0
    %387 = vmatpush1.xpose.msra.mxu0 0.0
    %388 = vmatprep.subr.mxu0 0.0
    %v389 = vand.u32 %v101, 4294901760
    %390 = vmatpush1.xpose.msra.mxu0 %v389
    %391 = vmatprep.subr.mxu0 0.0
    %v392 = vand.u32 %v98, 4294901760
    %393 = vmatpush1.xpose.msra.mxu0 %v392
    %394 = vmatprep.subr.mxu0 0.0
    %395 = vmatpush2.xpose.msra.mxu0 0.0
    %396 = vmatprep.subr.mxu0 0.0
    %397 = vmatpush2.xpose.msra.mxu0 0.0
    %398 = vmatprep.subr.mxu0 0.0
    %399 = vmatpush2.xpose.msra.mxu0 0.0
    %400 = vmatprep.subr.mxu0 0.0
    %401 = vmatpush2.xpose.msra.mxu0 0.0
    %402 = vmatprep.subr.mxu0 0.0
    %403 = vmatpush2.xpose.msra.mxu0 0.0
    %404 = vmatprep.subr.mxu0 0.0
    %405 = vmatpush2.xpose.msra.mxu0 0.0
    %406 = vmatprep.subr.mxu0 0.0
    %407 = vmatpush2.xpose.msra.mxu0 0.0
    %408 = vmatprep.subr.mxu0 0.0
    %409 = vmatpush2.xpose.msra.mxu0 0.0
    %410 = vmatprep.subr.mxu0 0.0
    %411 = vmatpush2.xpose.msra.mxu0 0.0
    %412 = vmatprep.subr.mxu0 0.0
    %413 = vmatpush2.xpose.msra.mxu0 0.0
    %414 = vmatprep.subr.mxu0 0.0
    %415 = vmatpush2.xpose.msra.mxu0 0.0
    %416 = vmatprep.subr.mxu0 0.0
    %417 = vmatpush2.xpose.msra.mxu0 0.0
    %418 = vmatprep.subr.mxu0 0.0
    %419 = vmatpush2.xpose.msra.mxu0 0.0
    %420 = vmatprep.subr.mxu0 0.0
    %421 = vmatpush2.xpose.msra.mxu0 0.0
    %422 = vmatprep.subr.mxu0 0.0
    %423 = vmatpush2.xpose.msra.mxu0 0.0
    %424 = vmatprep.subr.mxu0 0.0
    %425 = vmatpush2.xpose.msra.mxu0 0.0
    %426 = vmatprep.mubr.f32.mxu0 0.0
    %v427 = vand.u32 %v92, 4294901760
    %v428 = vsub.f32 %v92, %v427
    %v429 = vand.u32 %v428, 4294901760
    %430 = vmatmul.mubr.f32.gmra.mxu0 %v429
    %v431 = vpop.f32.mrf.mxu0
    %v432 = vadd.f32 %v350, %v431
    %v433 = vpop.f32.mrf.mxu0
    %434 = vmatprep.mubr.f32.mxu0 0.0
    %v435 = vand.u32 %v95, 4294901760
    %v436 = vsub.f32 %v95, %v435
    %v437 = vand.u32 %v436, 4294901760
    %438 = vmatmul.mubr.f32.gmra.mxu0 %v437
    %v439 = vpop.f32.mrf.mxu0
    %v440 = vadd.f32 %v357, %v439
    %v441 = vpop.f32.mrf.mxu0
    %442 = vdwg.mxu0
    %443 = vmatprep.subr.mxu0 0.0
    %444 = vmatpush1.xpose.msra.mxu0 0.0
    %445 = vmatprep.subr.mxu0 0.0
    %446 = vmatpush1.xpose.msra.mxu0 0.0
    %447 = vmatprep.subr.mxu0 0.0
    %448 = vmatpush1.xpose.msra.mxu0 0.0
    %449 = vmatprep.subr.mxu0 0.0
    %450 = vmatpush1.xpose.msra.mxu0 0.0
    %451 = vmatprep.subr.mxu0 0.0
    %452 = vmatpush1.xpose.msra.mxu0 0.0
    %453 = vmatprep.subr.mxu0 0.0
    %454 = vmatpush1.xpose.msra.mxu0 0.0
    %455 = vmatprep.subr.mxu0 0.0
    %456 = vmatpush1.xpose.msra.mxu0 0.0
    %457 = vmatprep.subr.mxu0 0.0
    %458 = vmatpush1.xpose.msra.mxu0 0.0
    %459 = vmatprep.subr.mxu0 0.0
    %460 = vmatpush1.xpose.msra.mxu0 0.0
    %461 = vmatprep.subr.mxu0 0.0
    %462 = vmatpush1.xpose.msra.mxu0 0.0
    %463 = vmatprep.subr.mxu0 0.0
    %464 = vmatpush1.xpose.msra.mxu0 0.0
    %465 = vmatprep.subr.mxu0 0.0
    %466 = vmatpush1.xpose.msra.mxu0 0.0
    %467 = vmatprep.subr.mxu0 0.0
    %468 = vmatpush1.xpose.msra.mxu0 0.0
    %469 = vmatprep.subr.mxu0 0.0
    %470 = vmatpush1.xpose.msra.mxu0 0.0
    %471 = vmatprep.subr.mxu0 0.0
    %v472 = vand.u32 %v101, 4294901760
    %v473 = vsub.f32 %v101, %v472
    %v474 = vand.u32 %v473, 4294901760
    %475 = vmatpush1.xpose.msra.mxu0 %v474
    %476 = vmatprep.subr.mxu0 0.0
    %v477 = vand.u32 %v98, 4294901760
    %v478 = vsub.f32 %v98, %v477
    %v479 = vand.u32 %v478, 4294901760
    %480 = vmatpush1.xpose.msra.mxu0 %v479
    %481 = vmatprep.subr.mxu0 0.0
    %482 = vmatpush2.xpose.msra.mxu0 0.0
    %483 = vmatprep.subr.mxu0 0.0
    %484 = vmatpush2.xpose.msra.mxu0 0.0
    %485 = vmatprep.subr.mxu0 0.0
    %486 = vmatpush2.xpose.msra.mxu0 0.0
    %487 = vmatprep.subr.mxu0 0.0
    %488 = vmatpush2.xpose.msra.mxu0 0.0
    %489 = vmatprep.subr.mxu0 0.0
    %490 = vmatpush2.xpose.msra.mxu0 0.0
    %491 = vmatprep.subr.mxu0 0.0
    %492 = vmatpush2.xpose.msra.mxu0 0.0
    %493 = vmatprep.subr.mxu0 0.0
    %494 = vmatpush2.xpose.msra.mxu0 0.0
    %495 = vmatprep.subr.mxu0 0.0
    %496 = vmatpush2.xpose.msra.mxu0 0.0
    %497 = vmatprep.subr.mxu0 0.0
    %498 = vmatpush2.xpose.msra.mxu0 0.0
    %499 = vmatprep.subr.mxu0 0.0
    %500 = vmatpush2.xpose.msra.mxu0 0.0
    %501 = vmatprep.subr.mxu0 0.0
    %502 = vmatpush2.xpose.msra.mxu0 0.0
    %503 = vmatprep.subr.mxu0 0.0
    %504 = vmatpush2.xpose.msra.mxu0 0.0
    %505 = vmatprep.subr.mxu0 0.0
    %506 = vmatpush2.xpose.msra.mxu0 0.0
    %507 = vmatprep.subr.mxu0 0.0
    %508 = vmatpush2.xpose.msra.mxu0 0.0
    %509 = vmatprep.subr.mxu0 0.0
    %510 = vmatpush2.xpose.msra.mxu0 0.0
    %511 = vmatprep.subr.mxu0 0.0
    %512 = vmatpush2.xpose.msra.mxu0 0.0
    %513 = vmatprep.mubr.f32.mxu0 0.0
    %v514 = vand.u32 %v92, 4294901760
    %515 = vmatmul.mubr.f32.gmra.mxu0 %v514
    %v516 = vpop.f32.mrf.mxu0
    %v517 = vadd.f32 %v432, %v516
    %v518 = vpop.f32.mrf.mxu0
    %519 = vmatprep.mubr.f32.mxu0 0.0
    %v520 = vand.u32 %v95, 4294901760
    %521 = vmatmul.mubr.f32.gmra.mxu0 %v520
    %v522 = vpop.f32.mrf.mxu0
    %v523 = vadd.f32 %v440, %v522
    %v524 = vpop.f32.mrf.mxu0
    %525 = vdwg.mxu0
    %526 = vmatprep.subr.mxu0 0.0
    %527 = vmatpush1.xpose.msra.mxu0 0.0
    %528 = vmatprep.subr.mxu0 0.0
    %529 = vmatpush1.xpose.msra.mxu0 0.0
    %530 = vmatprep.subr.mxu0 0.0
    %531 = vmatpush1.xpose.msra.mxu0 0.0
    %532 = vmatprep.subr.mxu0 0.0
    %533 = vmatpush1.xpose.msra.mxu0 0.0
    %534 = vmatprep.subr.mxu0 0.0
    %535 = vmatpush1.xpose.msra.mxu0 0.0
    %536 = vmatprep.subr.mxu0 0.0
    %537 = vmatpush1.xpose.msra.mxu0 0.0
    %538 = vmatprep.subr.mxu0 0.0
    %539 = vmatpush1.xpose.msra.mxu0 0.0
    %540 = vmatprep.subr.mxu0 0.0
    %541 = vmatpush1.xpose.msra.mxu0 0.0
    %542 = vmatprep.subr.mxu0 0.0
    %543 = vmatpush1.xpose.msra.mxu0 0.0
    %544 = vmatprep.subr.mxu0 0.0
    %545 = vmatpush1.xpose.msra.mxu0 0.0
    %546 = vmatprep.subr.mxu0 0.0
    %547 = vmatpush1.xpose.msra.mxu0 0.0
    %548 = vmatprep.subr.mxu0 0.0
    %549 = vmatpush1.xpose.msra.mxu0 0.0
    %550 = vmatprep.subr.mxu0 0.0
    %551 = vmatpush1.xpose.msra.mxu0 0.0
    %552 = vmatprep.subr.mxu0 0.0
    %553 = vmatpush1.xpose.msra.mxu0 0.0
    %554 = vmatprep.subr.mxu0 0.0
    %v555 = vand.u32 %v101, 4294901760
    %556 = vmatpush1.xpose.msra.mxu0 %v555
    %557 = vmatprep.subr.mxu0 0.0
    %v558 = vand.u32 %v98, 4294901760
    %559 = vmatpush1.xpose.msra.mxu0 %v558
    %560 = vmatprep.subr.mxu0 0.0
    %561 = vmatpush2.xpose.msra.mxu0 0.0
    %562 = vmatprep.subr.mxu0 0.0
    %563 = vmatpush2.xpose.msra.mxu0 0.0
    %564 = vmatprep.subr.mxu0 0.0
    %565 = vmatpush2.xpose.msra.mxu0 0.0
    %566 = vmatprep.subr.mxu0 0.0
    %567 = vmatpush2.xpose.msra.mxu0 0.0
    %568 = vmatprep.subr.mxu0 0.0
    %569 = vmatpush2.xpose.msra.mxu0 0.0
    %570 = vmatprep.subr.mxu0 0.0
    %571 = vmatpush2.xpose.msra.mxu0 0.0
    %572 = vmatprep.subr.mxu0 0.0
    %573 = vmatpush2.xpose.msra.mxu0 0.0
    %574 = vmatprep.subr.mxu0 0.0
    %575 = vmatpush2.xpose.msra.mxu0 0.0
    %576 = vmatprep.subr.mxu0 0.0
    %577 = vmatpush2.xpose.msra.mxu0 0.0
    %578 = vmatprep.subr.mxu0 0.0
    %579 = vmatpush2.xpose.msra.mxu0 0.0
    %580 = vmatprep.subr.mxu0 0.0
    %581 = vmatpush2.xpose.msra.mxu0 0.0
    %582 = vmatprep.subr.mxu0 0.0
    %583 = vmatpush2.xpose.msra.mxu0 0.0
    %584 = vmatprep.subr.mxu0 0.0
    %585 = vmatpush2.xpose.msra.mxu0 0.0
    %586 = vmatprep.subr.mxu0 0.0
    %587 = vmatpush2.xpose.msra.mxu0 0.0
    %588 = vmatprep.subr.mxu0 0.0
    %589 = vmatpush2.xpose.msra.mxu0 0.0
    %590 = vmatprep.subr.mxu0 0.0
    %591 = vmatpush2.xpose.msra.mxu0 0.0
    %592 = vmatprep.mubr.f32.mxu0 0.0
    %v593 = vand.u32 %v92, 4294901760
    %594 = vmatmul.mubr.f32.gmra.mxu0 %v593
    %v595 = vpop.f32.mrf.mxu0
    %v596 = vadd.f32 %v517, %v595
    %v597 = vpop.f32.mrf.mxu0
    %598 = vmatprep.mubr.f32.mxu0 0.0
    %v599 = vand.u32 %v95, 4294901760
    %600 = vmatmul.mubr.f32.gmra.mxu0 %v599
    %v601 = vpop.f32.mrf.mxu0
    %v602 = vadd.f32 %v523, %v601
    %v603 = vpop.f32.mrf.mxu0
    %604 = vdwg.mxu0
    %vm605 = vcmask 130048
    %v606 = vsel %vm605, %v596, -inf
    %v607 = vrot.slane %v606, 4
    %v608 = vmax.f32 %v606, %v607
    %v609 = vrot.slane %v608, 2
    %v610 = vmax.f32 %v608, %v609
    %v611 = vrot.slane %v610, 1
    %v612 = vmax.f32 %v610, %v611
    %v613 = vsel %vm605, %v602, -inf
    %v614 = vrot.slane %v613, 4
    %v615 = vmax.f32 %v613, %v614
    %v616 = vrot.slane %v615, 2
    %v617 = vmax.f32 %v615, %v616
    %v618 = vrot.slane %v617, 1
    %v619 = vmax.f32 %v617, %v618
    %v620 = vsub.f32 %v596, %v612
    %v621 = vsub.f32 %v602, %v619
    %v622 = vmul.f32 %v620, 1.442695
    %v623 = vpow.pop %v622
    %v624 = vmul.f32 %v621, 1.442695
    %v625 = vpow.pop %v624
    %v626 = vsel %vm605, %v623, 0.0
    %v627 = vrot.slane %v626, 4
    %v628 = vadd.f32 %v626, %v627
    %v629 = vrot.slane %v628, 2
    %v630 = vadd.f32 %v628, %v629
    %v631 = vrot.slane %v630, 1
    %v632 = vadd.f32 %v630, %v631
    %v633 = vsel %vm605, %v625, 0.0
    %v634 = vrot.slane %v633, 4
    %v635 = vadd.f32 %v633, %v634
    %v636 = vrot.slane %v635, 2
    %v637 = vadd.f32 %v635, %v636
    %v638 = vrot.slane %v637, 1
    %v639 = vadd.f32 %v637, %v638
    %v640 = vrcp.pop %v632
    %v641 = vmul.f32 %v623, %v640
    %v642 = vrcp.pop %v639
    %v643 = vmul.f32 %v625, %v642
    %v644 = vld [vmem:[%s2] sm:$0xff]
    %v645 = vld [vmem:[%s2 + $0x8] sm:$0xff]
    %v647 = vsel %vm605, %v641, 0
    %v650 = vsel %vm605, %v643, 0
    %652 = vmatprep.subr.mxu0 0.0
    %653 = vmatpush1.msra.mxu0 0.0
    %654 = vmatprep.subr.mxu0 0.0
    %655 = vmatpush1.msra.mxu0 0.0
    %656 = vmatprep.subr.mxu0 0.0
    %657 = vmatpush1.msra.mxu0 0.0
    %658 = vmatprep.subr.mxu0 0.0
    %659 = vmatpush1.msra.mxu0 0.0
    %660 = vmatprep.subr.mxu0 0.0
    %661 = vmatpush1.msra.mxu0 0.0
    %662 = vmatprep.subr.mxu0 0.0
    %663 = vmatpush1.msra.mxu0 0.0
    %664 = vmatprep.subr.mxu0 0.0
    %665 = vmatpush1.msra.mxu0 0.0
    %666 = vmatprep.subr.mxu0 0.0
    %667 = vmatpush1.msra.mxu0 0.0
    %668 = vmatprep.subr.mxu0 0.0
    %669 = vmatpush1.msra.mxu0 0.0
    %670 = vmatprep.subr.mxu0 0.0
    %671 = vmatpush1.msra.mxu0 0.0
    %672 = vmatprep.subr.mxu0 0.0
    %673 = vmatpush1.msra.mxu0 0.0
    %674 = vmatprep.subr.mxu0 0.0
    %675 = vmatpush1.msra.mxu0 0.0
    %676 = vmatprep.subr.mxu0 0.0
    %677 = vmatpush1.msra.mxu0 0.0
    %678 = vmatprep.subr.mxu0 0.0
    %679 = vmatpush1.msra.mxu0 0.0
    %680 = vmatprep.subr.mxu0 0.0
    %v681 = vand.u32 %v645, 4294901760
    %682 = vmatpush1.msra.mxu0 %v681
    %683 = vmatprep.subr.mxu0 0.0
    %v684 = vand.u32 %v644, 4294901760
    %685 = vmatpush1.msra.mxu0 %v684
    %686 = vmatprep.subr.mxu0 0.0
    %687 = vmatpush2.msra.mxu0 0.0
    %688 = vmatprep.subr.mxu0 0.0
    %689 = vmatpush2.msra.mxu0 0.0
    %690 = vmatprep.subr.mxu0 0.0
    %691 = vmatpush2.msra.mxu0 0.0
    %692 = vmatprep.subr.mxu0 0.0
    %693 = vmatpush2.msra.mxu0 0.0
    %694 = vmatprep.subr.mxu0 0.0
    %695 = vmatpush2.msra.mxu0 0.0
    %696 = vmatprep.subr.mxu0 0.0
    %697 = vmatpush2.msra.mxu0 0.0
    %698 = vmatprep.subr.mxu0 0.0
    %699 = vmatpush2.msra.mxu0 0.0
    %700 = vmatprep.subr.mxu0 0.0
    %701 = vmatpush2.msra.mxu0 0.0
    %702 = vmatprep.subr.mxu0 0.0
    %703 = vmatpush2.msra.mxu0 0.0
    %704 = vmatprep.subr.mxu0 0.0
    %705 = vmatpush2.msra.mxu0 0.0
    %706 = vmatprep.subr.mxu0 0.0
    %707 = vmatpush2.msra.mxu0 0.0
    %708 = vmatprep.subr.mxu0 0.0
    %709 = vmatpush2.msra.mxu0 0.0
    %710 = vmatprep.subr.mxu0 0.0
    %711 = vmatpush2.msra.mxu0 0.0
    %712 = vmatprep.subr.mxu0 0.0
    %713 = vmatpush2.msra.mxu0 0.0
    %714 = vmatprep.subr.mxu0 0.0
    %715 = vmatpush2.msra.mxu0 0.0
    %716 = vmatprep.subr.mxu0 0.0
    %717 = vmatpush2.msra.mxu0 0.0
    %718 = vmatprep.mubr.f32.mxu0 0.0
    %v719 = vand.u32 %v647, 4294901760
    %v720 = vsub.f32 %v647, %v719
    %v721 = vand.u32 %v720, 4294901760
    %v722 = vsub.f32 %v720, %v721
    %v723 = vand.u32 %v722, 4294901760
    %724 = vmatmul.mubr.f32.gmra.mxu0 %v723
    %v725 = vpop.f32.mrf.mxu0
    %v726 = vadd.f32 0.0, %v725
    %v727 = vpop.f32.mrf.mxu0
    %728 = vmatprep.mubr.f32.mxu0 0.0
    %v729 = vand.u32 %v650, 4294901760
    %v730 = vsub.f32 %v650, %v729
    %v731 = vand.u32 %v730, 4294901760
    %v732 = vsub.f32 %v730, %v731
    %v733 = vand.u32 %v732, 4294901760
    %734 = vmatmul.mubr.f32.gmra.mxu0 %v733
    %v735 = vpop.f32.mrf.mxu0
    %v736 = vadd.f32 0.0, %v735
    %v737 = vpop.f32.mrf.mxu0
    %738 = vdwg.mxu0
    %739 = vmatprep.subr.mxu0 0.0
    %740 = vmatpush1.msra.mxu0 0.0
    %741 = vmatprep.subr.mxu0 0.0
    %742 = vmatpush1.msra.mxu0 0.0
    %743 = vmatprep.subr.mxu0 0.0
    %744 = vmatpush1.msra.mxu0 0.0
    %745 = vmatprep.subr.mxu0 0.0
    %746 = vmatpush1.msra.mxu0 0.0
    %747 = vmatprep.subr.mxu0 0.0
    %748 = vmatpush1.msra.mxu0 0.0
    %749 = vmatprep.subr.mxu0 0.0
    %750 = vmatpush1.msra.mxu0 0.0
    %751 = vmatprep.subr.mxu0 0.0
    %752 = vmatpush1.msra.mxu0 0.0
    %753 = vmatprep.subr.mxu0 0.0
    %754 = vmatpush1.msra.mxu0 0.0
    %755 = vmatprep.subr.mxu0 0.0
    %756 = vmatpush1.msra.mxu0 0.0
    %757 = vmatprep.subr.mxu0 0.0
    %758 = vmatpush1.msra.mxu0 0.0
    %759 = vmatprep.subr.mxu0 0.0
    %760 = vmatpush1.msra.mxu0 0.0
    %761 = vmatprep.subr.mxu0 0.0
    %762 = vmatpush1.msra.mxu0 0.0
    %763 = vmatprep.subr.mxu0 0.0
    %764 = vmatpush1.msra.mxu0 0.0
    %765 = vmatprep.subr.mxu0 0.0
    %766 = vmatpush1.msra.mxu0 0.0
    %767 = vmatprep.subr.mxu0 0.0
    %v768 = vand.u32 %v645, 4294901760
    %v769 = vsub.f32 %v645, %v768
    %v770 = vand.u32 %v769, 4294901760
    %v771 = vsub.f32 %v769, %v770
    %v772 = vand.u32 %v771, 4294901760
    %773 = vmatpush1.msra.mxu0 %v772
    %774 = vmatprep.subr.mxu0 0.0
    %v775 = vand.u32 %v644, 4294901760
    %v776 = vsub.f32 %v644, %v775
    %v777 = vand.u32 %v776, 4294901760
    %v778 = vsub.f32 %v776, %v777
    %v779 = vand.u32 %v778, 4294901760
    %780 = vmatpush1.msra.mxu0 %v779
    %781 = vmatprep.subr.mxu0 0.0
    %782 = vmatpush2.msra.mxu0 0.0
    %783 = vmatprep.subr.mxu0 0.0
    %784 = vmatpush2.msra.mxu0 0.0
    %785 = vmatprep.subr.mxu0 0.0
    %786 = vmatpush2.msra.mxu0 0.0
    %787 = vmatprep.subr.mxu0 0.0
    %788 = vmatpush2.msra.mxu0 0.0
    %789 = vmatprep.subr.mxu0 0.0
    %790 = vmatpush2.msra.mxu0 0.0
    %791 = vmatprep.subr.mxu0 0.0
    %792 = vmatpush2.msra.mxu0 0.0
    %793 = vmatprep.subr.mxu0 0.0
    %794 = vmatpush2.msra.mxu0 0.0
    %795 = vmatprep.subr.mxu0 0.0
    %796 = vmatpush2.msra.mxu0 0.0
    %797 = vmatprep.subr.mxu0 0.0
    %798 = vmatpush2.msra.mxu0 0.0
    %799 = vmatprep.subr.mxu0 0.0
    %800 = vmatpush2.msra.mxu0 0.0
    %801 = vmatprep.subr.mxu0 0.0
    %802 = vmatpush2.msra.mxu0 0.0
    %803 = vmatprep.subr.mxu0 0.0
    %804 = vmatpush2.msra.mxu0 0.0
    %805 = vmatprep.subr.mxu0 0.0
    %806 = vmatpush2.msra.mxu0 0.0
    %807 = vmatprep.subr.mxu0 0.0
    %808 = vmatpush2.msra.mxu0 0.0
    %809 = vmatprep.subr.mxu0 0.0
    %810 = vmatpush2.msra.mxu0 0.0
    %811 = vmatprep.subr.mxu0 0.0
    %812 = vmatpush2.msra.mxu0 0.0
    %813 = vmatprep.mubr.f32.mxu0 0.0
    %v814 = vand.u32 %v647, 4294901760
    %815 = vmatmul.mubr.f32.gmra.mxu0 %v814
    %v816 = vpop.f32.mrf.mxu0
    %v817 = vadd.f32 %v726, %v816
    %v818 = vpop.f32.mrf.mxu0
    %819 = vmatprep.mubr.f32.mxu0 0.0
    %v820 = vand.u32 %v650, 4294901760
    %821 = vmatmul.mubr.f32.gmra.mxu0 %v820
    %v822 = vpop.f32.mrf.mxu0
    %v823 = vadd.f32 %v736, %v822
    %v824 = vpop.f32.mrf.mxu0
    %825 = vdwg.mxu0
    %826 = vmatprep.subr.mxu0 0.0
    %827 = vmatpush1.msra.mxu0 0.0
    %828 = vmatprep.subr.mxu0 0.0
    %829 = vmatpush1.msra.mxu0 0.0
    %830 = vmatprep.subr.mxu0 0.0
    %831 = vmatpush1.msra.mxu0 0.0
    %832 = vmatprep.subr.mxu0 0.0
    %833 = vmatpush1.msra.mxu0 0.0
    %834 = vmatprep.subr.mxu0 0.0
    %835 = vmatpush1.msra.mxu0 0.0
    %836 = vmatprep.subr.mxu0 0.0
    %837 = vmatpush1.msra.mxu0 0.0
    %838 = vmatprep.subr.mxu0 0.0
    %839 = vmatpush1.msra.mxu0 0.0
    %840 = vmatprep.subr.mxu0 0.0
    %841 = vmatpush1.msra.mxu0 0.0
    %842 = vmatprep.subr.mxu0 0.0
    %843 = vmatpush1.msra.mxu0 0.0
    %844 = vmatprep.subr.mxu0 0.0
    %845 = vmatpush1.msra.mxu0 0.0
    %846 = vmatprep.subr.mxu0 0.0
    %847 = vmatpush1.msra.mxu0 0.0
    %848 = vmatprep.subr.mxu0 0.0
    %849 = vmatpush1.msra.mxu0 0.0
    %850 = vmatprep.subr.mxu0 0.0
    %851 = vmatpush1.msra.mxu0 0.0
    %852 = vmatprep.subr.mxu0 0.0
    %853 = vmatpush1.msra.mxu0 0.0
    %854 = vmatprep.subr.mxu0 0.0
    %v855 = vand.u32 %v645, 4294901760
    %v856 = vsub.f32 %v645, %v855
    %857 = vmatpush1.msra.mxu0 %v856
    %858 = vmatprep.subr.mxu0 0.0
    %v859 = vand.u32 %v644, 4294901760
    %v860 = vsub.f32 %v644, %v859
    %861 = vmatpush1.msra.mxu0 %v860
    %862 = vmatprep.subr.mxu0 0.0
    %863 = vmatpush2.msra.mxu0 0.0
    %864 = vmatprep.subr.mxu0 0.0
    %865 = vmatpush2.msra.mxu0 0.0
    %866 = vmatprep.subr.mxu0 0.0
    %867 = vmatpush2.msra.mxu0 0.0
    %868 = vmatprep.subr.mxu0 0.0
    %869 = vmatpush2.msra.mxu0 0.0
    %870 = vmatprep.subr.mxu0 0.0
    %871 = vmatpush2.msra.mxu0 0.0
    %872 = vmatprep.subr.mxu0 0.0
    %873 = vmatpush2.msra.mxu0 0.0
    %874 = vmatprep.subr.mxu0 0.0
    %875 = vmatpush2.msra.mxu0 0.0
    %876 = vmatprep.subr.mxu0 0.0
    %877 = vmatpush2.msra.mxu0 0.0
    %878 = vmatprep.subr.mxu0 0.0
    %879 = vmatpush2.msra.mxu0 0.0
    %880 = vmatprep.subr.mxu0 0.0
    %881 = vmatpush2.msra.mxu0 0.0
    %882 = vmatprep.subr.mxu0 0.0
    %883 = vmatpush2.msra.mxu0 0.0
    %884 = vmatprep.subr.mxu0 0.0
    %885 = vmatpush2.msra.mxu0 0.0
    %886 = vmatprep.subr.mxu0 0.0
    %887 = vmatpush2.msra.mxu0 0.0
    %888 = vmatprep.subr.mxu0 0.0
    %889 = vmatpush2.msra.mxu0 0.0
    %890 = vmatprep.subr.mxu0 0.0
    %891 = vmatpush2.msra.mxu0 0.0
    %892 = vmatprep.subr.mxu0 0.0
    %893 = vmatpush2.msra.mxu0 0.0
    %894 = vmatprep.mubr.f32.mxu0 0.0
    %v895 = vand.u32 %v647, 4294901760
    %v896 = vsub.f32 %v647, %v895
    %897 = vmatmul.mubr.f32.gmra.mxu0 %v896
    %v898 = vpop.f32.mrf.mxu0
    %v899 = vadd.f32 %v817, %v898
    %v900 = vpop.f32.mrf.mxu0
    %901 = vmatprep.mubr.f32.mxu0 0.0
    %v902 = vand.u32 %v650, 4294901760
    %v903 = vsub.f32 %v650, %v902
    %904 = vmatmul.mubr.f32.gmra.mxu0 %v903
    %v905 = vpop.f32.mrf.mxu0
    %v906 = vadd.f32 %v823, %v905
    %v907 = vpop.f32.mrf.mxu0
    %908 = vdwg.mxu0
    %909 = vmatprep.subr.mxu0 0.0
    %910 = vmatpush1.msra.mxu0 0.0
    %911 = vmatprep.subr.mxu0 0.0
    %912 = vmatpush1.msra.mxu0 0.0
    %913 = vmatprep.subr.mxu0 0.0
    %914 = vmatpush1.msra.mxu0 0.0
    %915 = vmatprep.subr.mxu0 0.0
    %916 = vmatpush1.msra.mxu0 0.0
    %917 = vmatprep.subr.mxu0 0.0
    %918 = vmatpush1.msra.mxu0 0.0
    %919 = vmatprep.subr.mxu0 0.0
    %920 = vmatpush1.msra.mxu0 0.0
    %921 = vmatprep.subr.mxu0 0.0
    %922 = vmatpush1.msra.mxu0 0.0
    %923 = vmatprep.subr.mxu0 0.0
    %924 = vmatpush1.msra.mxu0 0.0
    %925 = vmatprep.subr.mxu0 0.0
    %926 = vmatpush1.msra.mxu0 0.0
    %927 = vmatprep.subr.mxu0 0.0
    %928 = vmatpush1.msra.mxu0 0.0
    %929 = vmatprep.subr.mxu0 0.0
    %930 = vmatpush1.msra.mxu0 0.0
    %931 = vmatprep.subr.mxu0 0.0
    %932 = vmatpush1.msra.mxu0 0.0
    %933 = vmatprep.subr.mxu0 0.0
    %934 = vmatpush1.msra.mxu0 0.0
    %935 = vmatprep.subr.mxu0 0.0
    %936 = vmatpush1.msra.mxu0 0.0
    %937 = vmatprep.subr.mxu0 0.0
    %v938 = vand.u32 %v645, 4294901760
    %939 = vmatpush1.msra.mxu0 %v938
    %940 = vmatprep.subr.mxu0 0.0
    %v941 = vand.u32 %v644, 4294901760
    %942 = vmatpush1.msra.mxu0 %v941
    %943 = vmatprep.subr.mxu0 0.0
    %944 = vmatpush2.msra.mxu0 0.0
    %945 = vmatprep.subr.mxu0 0.0
    %946 = vmatpush2.msra.mxu0 0.0
    %947 = vmatprep.subr.mxu0 0.0
    %948 = vmatpush2.msra.mxu0 0.0
    %949 = vmatprep.subr.mxu0 0.0
    %950 = vmatpush2.msra.mxu0 0.0
    %951 = vmatprep.subr.mxu0 0.0
    %952 = vmatpush2.msra.mxu0 0.0
    %953 = vmatprep.subr.mxu0 0.0
    %954 = vmatpush2.msra.mxu0 0.0
    %955 = vmatprep.subr.mxu0 0.0
    %956 = vmatpush2.msra.mxu0 0.0
    %957 = vmatprep.subr.mxu0 0.0
    %958 = vmatpush2.msra.mxu0 0.0
    %959 = vmatprep.subr.mxu0 0.0
    %960 = vmatpush2.msra.mxu0 0.0
    %961 = vmatprep.subr.mxu0 0.0
    %962 = vmatpush2.msra.mxu0 0.0
    %963 = vmatprep.subr.mxu0 0.0
    %964 = vmatpush2.msra.mxu0 0.0
    %965 = vmatprep.subr.mxu0 0.0
    %966 = vmatpush2.msra.mxu0 0.0
    %967 = vmatprep.subr.mxu0 0.0
    %968 = vmatpush2.msra.mxu0 0.0
    %969 = vmatprep.subr.mxu0 0.0
    %970 = vmatpush2.msra.mxu0 0.0
    %971 = vmatprep.subr.mxu0 0.0
    %972 = vmatpush2.msra.mxu0 0.0
    %973 = vmatprep.subr.mxu0 0.0
    %974 = vmatpush2.msra.mxu0 0.0
    %975 = vmatprep.mubr.f32.mxu0 0.0
    %v976 = vand.u32 %v647, 4294901760
    %v977 = vsub.f32 %v647, %v976
    %v978 = vand.u32 %v977, 4294901760
    %979 = vmatmul.mubr.f32.gmra.mxu0 %v978
    %v980 = vpop.f32.mrf.mxu0
    %v981 = vadd.f32 %v899, %v980
    %v982 = vpop.f32.mrf.mxu0
    %983 = vmatprep.mubr.f32.mxu0 0.0
    %v984 = vand.u32 %v650, 4294901760
    %v985 = vsub.f32 %v650, %v984
    %v986 = vand.u32 %v985, 4294901760
    %987 = vmatmul.mubr.f32.gmra.mxu0 %v986
    %v988 = vpop.f32.mrf.mxu0
    %v989 = vadd.f32 %v906, %v988
    %v990 = vpop.f32.mrf.mxu0
    %991 = vdwg.mxu0
    %992 = vmatprep.subr.mxu0 0.0
    %993 = vmatpush1.msra.mxu0 0.0
    %994 = vmatprep.subr.mxu0 0.0
    %995 = vmatpush1.msra.mxu0 0.0
    %996 = vmatprep.subr.mxu0 0.0
    %997 = vmatpush1.msra.mxu0 0.0
    %998 = vmatprep.subr.mxu0 0.0
    %999 = vmatpush1.msra.mxu0 0.0
    %1000 = vmatprep.subr.mxu0 0.0
    %1001 = vmatpush1.msra.mxu0 0.0
    %1002 = vmatprep.subr.mxu0 0.0
    %1003 = vmatpush1.msra.mxu0 0.0
    %1004 = vmatprep.subr.mxu0 0.0
    %1005 = vmatpush1.msra.mxu0 0.0
    %1006 = vmatprep.subr.mxu0 0.0
    %1007 = vmatpush1.msra.mxu0 0.0
    %1008 = vmatprep.subr.mxu0 0.0
    %1009 = vmatpush1.msra.mxu0 0.0
    %1010 = vmatprep.subr.mxu0 0.0
    %1011 = vmatpush1.msra.mxu0 0.0
    %1012 = vmatprep.subr.mxu0 0.0
    %1013 = vmatpush1.msra.mxu0 0.0
    %1014 = vmatprep.subr.mxu0 0.0
    %1015 = vmatpush1.msra.mxu0 0.0
    %1016 = vmatprep.subr.mxu0 0.0
    %1017 = vmatpush1.msra.mxu0 0.0
    %1018 = vmatprep.subr.mxu0 0.0
    %1019 = vmatpush1.msra.mxu0 0.0
    %1020 = vmatprep.subr.mxu0 0.0
    %v1021 = vand.u32 %v645, 4294901760
    %v1022 = vsub.f32 %v645, %v1021
    %v1023 = vand.u32 %v1022, 4294901760
    %1024 = vmatpush1.msra.mxu0 %v1023
    %1025 = vmatprep.subr.mxu0 0.0
    %v1026 = vand.u32 %v644, 4294901760
    %v1027 = vsub.f32 %v644, %v1026
    %v1028 = vand.u32 %v1027, 4294901760
    %1029 = vmatpush1.msra.mxu0 %v1028
    %1030 = vmatprep.subr.mxu0 0.0
    %1031 = vmatpush2.msra.mxu0 0.0
    %1032 = vmatprep.subr.mxu0 0.0
    %1033 = vmatpush2.msra.mxu0 0.0
    %1034 = vmatprep.subr.mxu0 0.0
    %1035 = vmatpush2.msra.mxu0 0.0
    %1036 = vmatprep.subr.mxu0 0.0
    %1037 = vmatpush2.msra.mxu0 0.0
    %1038 = vmatprep.subr.mxu0 0.0
    %1039 = vmatpush2.msra.mxu0 0.0
    %1040 = vmatprep.subr.mxu0 0.0
    %1041 = vmatpush2.msra.mxu0 0.0
    %1042 = vmatprep.subr.mxu0 0.0
    %1043 = vmatpush2.msra.mxu0 0.0
    %1044 = vmatprep.subr.mxu0 0.0
    %1045 = vmatpush2.msra.mxu0 0.0
    %1046 = vmatprep.subr.mxu0 0.0
    %1047 = vmatpush2.msra.mxu0 0.0
    %1048 = vmatprep.subr.mxu0 0.0
    %1049 = vmatpush2.msra.mxu0 0.0
    %1050 = vmatprep.subr.mxu0 0.0
    %1051 = vmatpush2.msra.mxu0 0.0
    %1052 = vmatprep.subr.mxu0 0.0
    %1053 = vmatpush2.msra.mxu0 0.0
    %1054 = vmatprep.subr.mxu0 0.0
    %1055 = vmatpush2.msra.mxu0 0.0
    %1056 = vmatprep.subr.mxu0 0.0
    %1057 = vmatpush2.msra.mxu0 0.0
    %1058 = vmatprep.subr.mxu0 0.0
    %1059 = vmatpush2.msra.mxu0 0.0
    %1060 = vmatprep.subr.mxu0 0.0
    %1061 = vmatpush2.msra.mxu0 0.0
    %1062 = vmatprep.mubr.f32.mxu0 0.0
    %v1063 = vand.u32 %v647, 4294901760
    %1064 = vmatmul.mubr.f32.gmra.mxu0 %v1063
    %v1065 = vpop.f32.mrf.mxu0
    %v1066 = vadd.f32 %v981, %v1065
    %v1067 = vpop.f32.mrf.mxu0
    %1068 = vmatprep.mubr.f32.mxu0 0.0
    %v1069 = vand.u32 %v650, 4294901760
    %1070 = vmatmul.mubr.f32.gmra.mxu0 %v1069
    %v1071 = vpop.f32.mrf.mxu0
    %v1072 = vadd.f32 %v989, %v1071
    %v1073 = vpop.f32.mrf.mxu0
    %1074 = vdwg.mxu0
    %1075 = vmatprep.subr.mxu0 0.0
    %1076 = vmatpush1.msra.mxu0 0.0
    %1077 = vmatprep.subr.mxu0 0.0
    %1078 = vmatpush1.msra.mxu0 0.0
    %1079 = vmatprep.subr.mxu0 0.0
    %1080 = vmatpush1.msra.mxu0 0.0
    %1081 = vmatprep.subr.mxu0 0.0
    %1082 = vmatpush1.msra.mxu0 0.0
    %1083 = vmatprep.subr.mxu0 0.0
    %1084 = vmatpush1.msra.mxu0 0.0
    %1085 = vmatprep.subr.mxu0 0.0
    %1086 = vmatpush1.msra.mxu0 0.0
    %1087 = vmatprep.subr.mxu0 0.0
    %1088 = vmatpush1.msra.mxu0 0.0
    %1089 = vmatprep.subr.mxu0 0.0
    %1090 = vmatpush1.msra.mxu0 0.0
    %1091 = vmatprep.subr.mxu0 0.0
    %1092 = vmatpush1.msra.mxu0 0.0
    %1093 = vmatprep.subr.mxu0 0.0
    %1094 = vmatpush1.msra.mxu0 0.0
    %1095 = vmatprep.subr.mxu0 0.0
    %1096 = vmatpush1.msra.mxu0 0.0
    %1097 = vmatprep.subr.mxu0 0.0
    %1098 = vmatpush1.msra.mxu0 0.0
    %1099 = vmatprep.subr.mxu0 0.0
    %1100 = vmatpush1.msra.mxu0 0.0
    %1101 = vmatprep.subr.mxu0 0.0
    %1102 = vmatpush1.msra.mxu0 0.0
    %1103 = vmatprep.subr.mxu0 0.0
    %v1104 = vand.u32 %v645, 4294901760
    %1105 = vmatpush1.msra.mxu0 %v1104
    %1106 = vmatprep.subr.mxu0 0.0
    %v1107 = vand.u32 %v644, 4294901760
    %1108 = vmatpush1.msra.mxu0 %v1107
    %1109 = vmatprep.subr.mxu0 0.0
    %1110 = vmatpush2.msra.mxu0 0.0
    %1111 = vmatprep.subr.mxu0 0.0
    %1112 = vmatpush2.msra.mxu0 0.0
    %1113 = vmatprep.subr.mxu0 0.0
    %1114 = vmatpush2.msra.mxu0 0.0
    %1115 = vmatprep.subr.mxu0 0.0
    %1116 = vmatpush2.msra.mxu0 0.0
    %1117 = vmatprep.subr.mxu0 0.0
    %1118 = vmatpush2.msra.mxu0 0.0
    %1119 = vmatprep.subr.mxu0 0.0
    %1120 = vmatpush2.msra.mxu0 0.0
    %1121 = vmatprep.subr.mxu0 0.0
    %1122 = vmatpush2.msra.mxu0 0.0
    %1123 = vmatprep.subr.mxu0 0.0
    %1124 = vmatpush2.msra.mxu0 0.0
    %1125 = vmatprep.subr.mxu0 0.0
    %1126 = vmatpush2.msra.mxu0 0.0
    %1127 = vmatprep.subr.mxu0 0.0
    %1128 = vmatpush2.msra.mxu0 0.0
    %1129 = vmatprep.subr.mxu0 0.0
    %1130 = vmatpush2.msra.mxu0 0.0
    %1131 = vmatprep.subr.mxu0 0.0
    %1132 = vmatpush2.msra.mxu0 0.0
    %1133 = vmatprep.subr.mxu0 0.0
    %1134 = vmatpush2.msra.mxu0 0.0
    %1135 = vmatprep.subr.mxu0 0.0
    %1136 = vmatpush2.msra.mxu0 0.0
    %1137 = vmatprep.subr.mxu0 0.0
    %1138 = vmatpush2.msra.mxu0 0.0
    %1139 = vmatprep.subr.mxu0 0.0
    %1140 = vmatpush2.msra.mxu0 0.0
    %1141 = vmatprep.mubr.f32.mxu0 0.0
    %v1142 = vand.u32 %v647, 4294901760
    %1143 = vmatmul.mubr.f32.gmra.mxu0 %v1142
    %v1144 = vpop.f32.mrf.mxu0
    %v1145 = vadd.f32 %v1066, %v1144
    %v1146 = vpop.f32.mrf.mxu0
    %1147 = vmatprep.mubr.f32.mxu0 0.0
    %v1148 = vand.u32 %v650, 4294901760
    %1149 = vmatmul.mubr.f32.gmra.mxu0 %v1148
    %v1150 = vpop.f32.mrf.mxu0
    %v1151 = vadd.f32 %v1072, %v1150
    %v1152 = vpop.f32.mrf.mxu0
    %1153 = vdwg.mxu0
    %1155 = vset.pattern.permute.xlu0 0
    %1156 = vperm.xlu0 %1155, %v1145
    %v1157 = vpop.permute.xlu0 %1156
    %1160 = vset.pattern.permute.xlu0 0
    %1161 = vperm.xlu0 %1160, %v1151
    %v1162 = vpop.permute.xlu0 %1161
    %v1164 = vmul.f32 %v1157, %v87
    %v1165 = vmul.f32 %v1162, %v88
    %v1166 = vsel %vm71, %v1164, 0.0
    %v1167 = vrot.slane %v1166, 4
    %v1168 = vadd.f32 %v1166, %v1167
    %v1169 = vrot.slane %v1168, 2
    %v1170 = vadd.f32 %v1168, %v1169
    %v1171 = vrot.slane %v1170, 1
    %v1172 = vadd.f32 %v1170, %v1171
    %v1173 = vsel %vm71, %v1165, 0.0
    %v1174 = vrot.slane %v1173, 4
    %v1175 = vadd.f32 %v1173, %v1174
    %v1176 = vrot.slane %v1175, 2
    %v1177 = vadd.f32 %v1175, %v1176
    %v1178 = vrot.slane %v1177, 1
    %v1179 = vadd.f32 %v1177, %v1178
    %1180 = vset.pattern.permute.xlu0 1
    %1181 = vperm.xlu0 %1180, %v1145
    %v1182 = vpop.permute.xlu0 %1181
    %1184 = vset.pattern.permute.xlu0 1
    %1185 = vperm.xlu0 %1184, %v1151
    %v1186 = vpop.permute.xlu0 %1185
    %v1188 = vmul.f32 %v1182, %v87
    %v1189 = vmul.f32 %v1186, %v88
    %v1190 = vsel %vm71, %v1188, 0.0
    %v1191 = vrot.slane %v1190, 4
    %v1192 = vadd.f32 %v1190, %v1191
    %v1193 = vrot.slane %v1192, 2
    %v1194 = vadd.f32 %v1192, %v1193
    %v1195 = vrot.slane %v1194, 1
    %v1196 = vadd.f32 %v1194, %v1195
    %v1197 = vsel %vm71, %v1189, 0.0
    %v1198 = vrot.slane %v1197, 4
    %v1199 = vadd.f32 %v1197, %v1198
    %v1200 = vrot.slane %v1199, 2
    %v1201 = vadd.f32 %v1199, %v1200
    %v1202 = vrot.slane %v1201, 1
    %v1203 = vadd.f32 %v1201, %v1202
    %1204 = vset.pattern.permute.xlu0 2
    %1205 = vperm.xlu0 %1204, %v1145
    %v1206 = vpop.permute.xlu0 %1205
    %1208 = vset.pattern.permute.xlu0 2
    %1209 = vperm.xlu0 %1208, %v1151
    %v1210 = vpop.permute.xlu0 %1209
    %v1212 = vmul.f32 %v1206, %v87
    %v1213 = vmul.f32 %v1210, %v88
    %v1214 = vsel %vm71, %v1212, 0.0
    %v1215 = vrot.slane %v1214, 4
    %v1216 = vadd.f32 %v1214, %v1215
    %v1217 = vrot.slane %v1216, 2
    %v1218 = vadd.f32 %v1216, %v1217
    %v1219 = vrot.slane %v1218, 1
    %v1220 = vadd.f32 %v1218, %v1219
    %v1221 = vsel %vm71, %v1213, 0.0
    %v1222 = vrot.slane %v1221, 4
    %v1223 = vadd.f32 %v1221, %v1222
    %v1224 = vrot.slane %v1223, 2
    %v1225 = vadd.f32 %v1223, %v1224
    %v1226 = vrot.slane %v1225, 1
    %v1227 = vadd.f32 %v1225, %v1226
    %1228 = vset.pattern.permute.xlu0 3
    %1229 = vperm.xlu0 %1228, %v1145
    %v1230 = vpop.permute.xlu0 %1229
    %1232 = vset.pattern.permute.xlu0 3
    %1233 = vperm.xlu0 %1232, %v1151
    %v1234 = vpop.permute.xlu0 %1233
    %v1236 = vmul.f32 %v1230, %v87
    %v1237 = vmul.f32 %v1234, %v88
    %v1238 = vsel %vm71, %v1236, 0.0
    %v1239 = vrot.slane %v1238, 4
    %v1240 = vadd.f32 %v1238, %v1239
    %v1241 = vrot.slane %v1240, 2
    %v1242 = vadd.f32 %v1240, %v1241
    %v1243 = vrot.slane %v1242, 1
    %v1244 = vadd.f32 %v1242, %v1243
    %v1245 = vsel %vm71, %v1237, 0.0
    %v1246 = vrot.slane %v1245, 4
    %v1247 = vadd.f32 %v1245, %v1246
    %v1248 = vrot.slane %v1247, 2
    %v1249 = vadd.f32 %v1247, %v1248
    %v1250 = vrot.slane %v1249, 1
    %v1251 = vadd.f32 %v1249, %v1250
    %vm1254 = vcmask 1041409
    %v1255 = vsel %vm1254, %v1179, %v1172
    %v1259 = vsel %vm1254, %v1203, %v1196
    %1260 = vrot.lane.b32.xlu0 %v1259, 32
    %v1261 = vpop.permute.xlu0 %1260
    %v1265 = vsel %vm1254, %v1227, %v1220
    %1266 = vrot.lane.b32.xlu0 %v1265, 64
    %v1267 = vpop.permute.xlu0 %1266
    %v1271 = vsel %vm1254, %v1251, %v1244
    %1272 = vrot.lane.b32.xlu0 %v1271, 96
    %v1273 = vpop.permute.xlu0 %1272
    %v1275 = vsel %vm71, %v1255, %v1261
    %vm1276 = vcmask 523264
    %v1277 = vsel %vm1276, %v1275, %v1267
    %vm1278 = vcmask 785408
    %v1279 = vsel %vm1278, %v1277, %v1273
    %v1280 = vld [vmem:[#allocation6] sm:$0xff]
    %v1281 = vld [vmem:[#allocation6 + $0x8] sm:$0xff]
    %v1282 = vld [vmem:[#allocation6 + $0x10] sm:$0xff]
    %v1283 = vld [vmem:[#allocation6 + $0x18] sm:$0xff]
    %v1284 = vld [vmem:[%s4] sm:$0x1]
    %v1286 = vlaneseq
    %v1287 = vshrl.u32 %v1286, 7
    %v1288 = vsub.s32 0, %v1287
    %v1289 = vrot.slane %v1284, %v1288
    %1291 = vmatprep.subr.mxu0 0.0
    %1292 = vmatpush1.xpose.msra.mxu0 0.0
    %1293 = vmatprep.subr.mxu0 0.0
    %1294 = vmatpush1.xpose.msra.mxu0 0.0
    %1295 = vmatprep.subr.mxu0 0.0
    %1296 = vmatpush1.xpose.msra.mxu0 0.0
    %1297 = vmatprep.subr.mxu0 0.0
    %1298 = vmatpush1.xpose.msra.mxu0 0.0
    %1299 = vmatprep.subr.mxu0 0.0
    %1300 = vmatpush1.xpose.msra.mxu0 0.0
    %1301 = vmatprep.subr.mxu0 0.0
    %1302 = vmatpush1.xpose.msra.mxu0 0.0
    %1303 = vmatprep.subr.mxu0 0.0
    %1304 = vmatpush1.xpose.msra.mxu0 0.0
    %1305 = vmatprep.subr.mxu0 0.0
    %1306 = vmatpush1.xpose.msra.mxu0 0.0
    %1307 = vmatprep.subr.mxu0 0.0
    %1308 = vmatpush1.xpose.msra.mxu0 0.0
    %1309 = vmatprep.subr.mxu0 0.0
    %1310 = vmatpush1.xpose.msra.mxu0 0.0
    %1311 = vmatprep.subr.mxu0 0.0
    %1312 = vmatpush1.xpose.msra.mxu0 0.0
    %1313 = vmatprep.subr.mxu0 0.0
    %1314 = vmatpush1.xpose.msra.mxu0 0.0
    %1315 = vmatprep.subr.mxu0 0.0
    %v1316 = vand.u32 %v1283, 4294901760
    %1317 = vmatpush1.xpose.msra.mxu0 %v1316
    %1318 = vmatprep.subr.mxu0 0.0
    %v1319 = vand.u32 %v1282, 4294901760
    %1320 = vmatpush1.xpose.msra.mxu0 %v1319
    %1321 = vmatprep.subr.mxu0 0.0
    %v1322 = vand.u32 %v1281, 4294901760
    %1323 = vmatpush1.xpose.msra.mxu0 %v1322
    %1324 = vmatprep.subr.mxu0 0.0
    %v1325 = vand.u32 %v1280, 4294901760
    %1326 = vmatpush1.xpose.msra.mxu0 %v1325
    %1327 = vmatprep.subr.mxu0 0.0
    %1328 = vmatpush2.xpose.msra.mxu0 0.0
    %1329 = vmatprep.subr.mxu0 0.0
    %1330 = vmatpush2.xpose.msra.mxu0 0.0
    %1331 = vmatprep.subr.mxu0 0.0
    %1332 = vmatpush2.xpose.msra.mxu0 0.0
    %1333 = vmatprep.subr.mxu0 0.0
    %1334 = vmatpush2.xpose.msra.mxu0 0.0
    %1335 = vmatprep.subr.mxu0 0.0
    %1336 = vmatpush2.xpose.msra.mxu0 0.0
    %1337 = vmatprep.subr.mxu0 0.0
    %1338 = vmatpush2.xpose.msra.mxu0 0.0
    %1339 = vmatprep.subr.mxu0 0.0
    %1340 = vmatpush2.xpose.msra.mxu0 0.0
    %1341 = vmatprep.subr.mxu0 0.0
    %1342 = vmatpush2.xpose.msra.mxu0 0.0
    %1343 = vmatprep.subr.mxu0 0.0
    %1344 = vmatpush2.xpose.msra.mxu0 0.0
    %1345 = vmatprep.subr.mxu0 0.0
    %1346 = vmatpush2.xpose.msra.mxu0 0.0
    %1347 = vmatprep.subr.mxu0 0.0
    %1348 = vmatpush2.xpose.msra.mxu0 0.0
    %1349 = vmatprep.subr.mxu0 0.0
    %1350 = vmatpush2.xpose.msra.mxu0 0.0
    %1351 = vmatprep.subr.mxu0 0.0
    %1352 = vmatpush2.xpose.msra.mxu0 0.0
    %1353 = vmatprep.subr.mxu0 0.0
    %1354 = vmatpush2.xpose.msra.mxu0 0.0
    %1355 = vmatprep.subr.mxu0 0.0
    %1356 = vmatpush2.xpose.msra.mxu0 0.0
    %1357 = vmatprep.subr.mxu0 0.0
    %1358 = vmatpush2.xpose.msra.mxu0 0.0
    %1359 = vmatprep.mubr.f32.mxu0 0.0
    %v1360 = vand.u32 %v1279, 4294901760
    %v1361 = vsub.f32 %v1279, %v1360
    %v1362 = vand.u32 %v1361, 4294901760
    %v1363 = vsub.f32 %v1361, %v1362
    %v1364 = vand.u32 %v1363, 4294901760
    %1365 = vmatmul.mubr.f32.gmra.mxu0 %v1364
    %v1366 = vpop.f32.mrf.mxu0
    %v1367 = vadd.f32 %v1289, %v1366
    %v1368 = vpop.f32.mrf.mxu0
    %1369 = vdwg.mxu0
    %1370 = vmatprep.subr.mxu0 0.0
    %1371 = vmatpush1.xpose.msra.mxu0 0.0
    %1372 = vmatprep.subr.mxu0 0.0
    %1373 = vmatpush1.xpose.msra.mxu0 0.0
    %1374 = vmatprep.subr.mxu0 0.0
    %1375 = vmatpush1.xpose.msra.mxu0 0.0
    %1376 = vmatprep.subr.mxu0 0.0
    %1377 = vmatpush1.xpose.msra.mxu0 0.0
    %1378 = vmatprep.subr.mxu0 0.0
    %1379 = vmatpush1.xpose.msra.mxu0 0.0
    %1380 = vmatprep.subr.mxu0 0.0
    %1381 = vmatpush1.xpose.msra.mxu0 0.0
    %1382 = vmatprep.subr.mxu0 0.0
    %1383 = vmatpush1.xpose.msra.mxu0 0.0
    %1384 = vmatprep.subr.mxu0 0.0
    %1385 = vmatpush1.xpose.msra.mxu0 0.0
    %1386 = vmatprep.subr.mxu0 0.0
    %1387 = vmatpush1.xpose.msra.mxu0 0.0
    %1388 = vmatprep.subr.mxu0 0.0
    %1389 = vmatpush1.xpose.msra.mxu0 0.0
    %1390 = vmatprep.subr.mxu0 0.0
    %1391 = vmatpush1.xpose.msra.mxu0 0.0
    %1392 = vmatprep.subr.mxu0 0.0
    %1393 = vmatpush1.xpose.msra.mxu0 0.0
    %1394 = vmatprep.subr.mxu0 0.0
    %v1395 = vand.u32 %v1283, 4294901760
    %v1396 = vsub.f32 %v1283, %v1395
    %v1397 = vand.u32 %v1396, 4294901760
    %v1398 = vsub.f32 %v1396, %v1397
    %v1399 = vand.u32 %v1398, 4294901760
    %1400 = vmatpush1.xpose.msra.mxu0 %v1399
    %1401 = vmatprep.subr.mxu0 0.0
    %v1402 = vand.u32 %v1282, 4294901760
    %v1403 = vsub.f32 %v1282, %v1402
    %v1404 = vand.u32 %v1403, 4294901760
    %v1405 = vsub.f32 %v1403, %v1404
    %v1406 = vand.u32 %v1405, 4294901760
    %1407 = vmatpush1.xpose.msra.mxu0 %v1406
    %1408 = vmatprep.subr.mxu0 0.0
    %v1409 = vand.u32 %v1281, 4294901760
    %v1410 = vsub.f32 %v1281, %v1409
    %v1411 = vand.u32 %v1410, 4294901760
    %v1412 = vsub.f32 %v1410, %v1411
    %v1413 = vand.u32 %v1412, 4294901760
    %1414 = vmatpush1.xpose.msra.mxu0 %v1413
    %1415 = vmatprep.subr.mxu0 0.0
    %v1416 = vand.u32 %v1280, 4294901760
    %v1417 = vsub.f32 %v1280, %v1416
    %v1418 = vand.u32 %v1417, 4294901760
    %v1419 = vsub.f32 %v1417, %v1418
    %v1420 = vand.u32 %v1419, 4294901760
    %1421 = vmatpush1.xpose.msra.mxu0 %v1420
    %1422 = vmatprep.subr.mxu0 0.0
    %1423 = vmatpush2.xpose.msra.mxu0 0.0
    %1424 = vmatprep.subr.mxu0 0.0
    %1425 = vmatpush2.xpose.msra.mxu0 0.0
    %1426 = vmatprep.subr.mxu0 0.0
    %1427 = vmatpush2.xpose.msra.mxu0 0.0
    %1428 = vmatprep.subr.mxu0 0.0
    %1429 = vmatpush2.xpose.msra.mxu0 0.0
    %1430 = vmatprep.subr.mxu0 0.0
    %1431 = vmatpush2.xpose.msra.mxu0 0.0
    %1432 = vmatprep.subr.mxu0 0.0
    %1433 = vmatpush2.xpose.msra.mxu0 0.0
    %1434 = vmatprep.subr.mxu0 0.0
    %1435 = vmatpush2.xpose.msra.mxu0 0.0
    %1436 = vmatprep.subr.mxu0 0.0
    %1437 = vmatpush2.xpose.msra.mxu0 0.0
    %1438 = vmatprep.subr.mxu0 0.0
    %1439 = vmatpush2.xpose.msra.mxu0 0.0
    %1440 = vmatprep.subr.mxu0 0.0
    %1441 = vmatpush2.xpose.msra.mxu0 0.0
    %1442 = vmatprep.subr.mxu0 0.0
    %1443 = vmatpush2.xpose.msra.mxu0 0.0
    %1444 = vmatprep.subr.mxu0 0.0
    %1445 = vmatpush2.xpose.msra.mxu0 0.0
    %1446 = vmatprep.subr.mxu0 0.0
    %1447 = vmatpush2.xpose.msra.mxu0 0.0
    %1448 = vmatprep.subr.mxu0 0.0
    %1449 = vmatpush2.xpose.msra.mxu0 0.0
    %1450 = vmatprep.subr.mxu0 0.0
    %1451 = vmatpush2.xpose.msra.mxu0 0.0
    %1452 = vmatprep.subr.mxu0 0.0
    %1453 = vmatpush2.xpose.msra.mxu0 0.0
    %1454 = vmatprep.mubr.f32.mxu0 0.0
    %v1455 = vand.u32 %v1279, 4294901760
    %1456 = vmatmul.mubr.f32.gmra.mxu0 %v1455
    %v1457 = vpop.f32.mrf.mxu0
    %v1458 = vadd.f32 %v1367, %v1457
    %v1459 = vpop.f32.mrf.mxu0
    %1460 = vdwg.mxu0
    %1461 = vmatprep.subr.mxu0 0.0
    %1462 = vmatpush1.xpose.msra.mxu0 0.0
    %1463 = vmatprep.subr.mxu0 0.0
    %1464 = vmatpush1.xpose.msra.mxu0 0.0
    %1465 = vmatprep.subr.mxu0 0.0
    %1466 = vmatpush1.xpose.msra.mxu0 0.0
    %1467 = vmatprep.subr.mxu0 0.0
    %1468 = vmatpush1.xpose.msra.mxu0 0.0
    %1469 = vmatprep.subr.mxu0 0.0
    %1470 = vmatpush1.xpose.msra.mxu0 0.0
    %1471 = vmatprep.subr.mxu0 0.0
    %1472 = vmatpush1.xpose.msra.mxu0 0.0
    %1473 = vmatprep.subr.mxu0 0.0
    %1474 = vmatpush1.xpose.msra.mxu0 0.0
    %1475 = vmatprep.subr.mxu0 0.0
    %1476 = vmatpush1.xpose.msra.mxu0 0.0
    %1477 = vmatprep.subr.mxu0 0.0
    %1478 = vmatpush1.xpose.msra.mxu0 0.0
    %1479 = vmatprep.subr.mxu0 0.0
    %1480 = vmatpush1.xpose.msra.mxu0 0.0
    %1481 = vmatprep.subr.mxu0 0.0
    %1482 = vmatpush1.xpose.msra.mxu0 0.0
    %1483 = vmatprep.subr.mxu0 0.0
    %1484 = vmatpush1.xpose.msra.mxu0 0.0
    %1485 = vmatprep.subr.mxu0 0.0
    %v1486 = vand.u32 %v1283, 4294901760
    %v1487 = vsub.f32 %v1283, %v1486
    %1488 = vmatpush1.xpose.msra.mxu0 %v1487
    %1489 = vmatprep.subr.mxu0 0.0
    %v1490 = vand.u32 %v1282, 4294901760
    %v1491 = vsub.f32 %v1282, %v1490
    %1492 = vmatpush1.xpose.msra.mxu0 %v1491
    %1493 = vmatprep.subr.mxu0 0.0
    %v1494 = vand.u32 %v1281, 4294901760
    %v1495 = vsub.f32 %v1281, %v1494
    %1496 = vmatpush1.xpose.msra.mxu0 %v1495
    %1497 = vmatprep.subr.mxu0 0.0
    %v1498 = vand.u32 %v1280, 4294901760
    %v1499 = vsub.f32 %v1280, %v1498
    %1500 = vmatpush1.xpose.msra.mxu0 %v1499
    %1501 = vmatprep.subr.mxu0 0.0
    %1502 = vmatpush2.xpose.msra.mxu0 0.0
    %1503 = vmatprep.subr.mxu0 0.0
    %1504 = vmatpush2.xpose.msra.mxu0 0.0
    %1505 = vmatprep.subr.mxu0 0.0
    %1506 = vmatpush2.xpose.msra.mxu0 0.0
    %1507 = vmatprep.subr.mxu0 0.0
    %1508 = vmatpush2.xpose.msra.mxu0 0.0
    %1509 = vmatprep.subr.mxu0 0.0
    %1510 = vmatpush2.xpose.msra.mxu0 0.0
    %1511 = vmatprep.subr.mxu0 0.0
    %1512 = vmatpush2.xpose.msra.mxu0 0.0
    %1513 = vmatprep.subr.mxu0 0.0
    %1514 = vmatpush2.xpose.msra.mxu0 0.0
    %1515 = vmatprep.subr.mxu0 0.0
    %1516 = vmatpush2.xpose.msra.mxu0 0.0
    %1517 = vmatprep.subr.mxu0 0.0
    %1518 = vmatpush2.xpose.msra.mxu0 0.0
    %1519 = vmatprep.subr.mxu0 0.0
    %1520 = vmatpush2.xpose.msra.mxu0 0.0
    %1521 = vmatprep.subr.mxu0 0.0
    %1522 = vmatpush2.xpose.msra.mxu0 0.0
    %1523 = vmatprep.subr.mxu0 0.0
    %1524 = vmatpush2.xpose.msra.mxu0 0.0
    %1525 = vmatprep.subr.mxu0 0.0
    %1526 = vmatpush2.xpose.msra.mxu0 0.0
    %1527 = vmatprep.subr.mxu0 0.0
    %1528 = vmatpush2.xpose.msra.mxu0 0.0
    %1529 = vmatprep.subr.mxu0 0.0
    %1530 = vmatpush2.xpose.msra.mxu0 0.0
    %1531 = vmatprep.subr.mxu0 0.0
    %1532 = vmatpush2.xpose.msra.mxu0 0.0
    %1533 = vmatprep.mubr.f32.mxu0 0.0
    %v1534 = vand.u32 %v1279, 4294901760
    %v1535 = vsub.f32 %v1279, %v1534
    %1536 = vmatmul.mubr.f32.gmra.mxu0 %v1535
    %v1537 = vpop.f32.mrf.mxu0
    %v1538 = vadd.f32 %v1458, %v1537
    %v1539 = vpop.f32.mrf.mxu0
    %1540 = vdwg.mxu0
    %1541 = vmatprep.subr.mxu0 0.0
    %1542 = vmatpush1.xpose.msra.mxu0 0.0
    %1543 = vmatprep.subr.mxu0 0.0
    %1544 = vmatpush1.xpose.msra.mxu0 0.0
    %1545 = vmatprep.subr.mxu0 0.0
    %1546 = vmatpush1.xpose.msra.mxu0 0.0
    %1547 = vmatprep.subr.mxu0 0.0
    %1548 = vmatpush1.xpose.msra.mxu0 0.0
    %1549 = vmatprep.subr.mxu0 0.0
    %1550 = vmatpush1.xpose.msra.mxu0 0.0
    %1551 = vmatprep.subr.mxu0 0.0
    %1552 = vmatpush1.xpose.msra.mxu0 0.0
    %1553 = vmatprep.subr.mxu0 0.0
    %1554 = vmatpush1.xpose.msra.mxu0 0.0
    %1555 = vmatprep.subr.mxu0 0.0
    %1556 = vmatpush1.xpose.msra.mxu0 0.0
    %1557 = vmatprep.subr.mxu0 0.0
    %1558 = vmatpush1.xpose.msra.mxu0 0.0
    %1559 = vmatprep.subr.mxu0 0.0
    %1560 = vmatpush1.xpose.msra.mxu0 0.0
    %1561 = vmatprep.subr.mxu0 0.0
    %1562 = vmatpush1.xpose.msra.mxu0 0.0
    %1563 = vmatprep.subr.mxu0 0.0
    %1564 = vmatpush1.xpose.msra.mxu0 0.0
    %1565 = vmatprep.subr.mxu0 0.0
    %v1566 = vand.u32 %v1283, 4294901760
    %1567 = vmatpush1.xpose.msra.mxu0 %v1566
    %1568 = vmatprep.subr.mxu0 0.0
    %v1569 = vand.u32 %v1282, 4294901760
    %1570 = vmatpush1.xpose.msra.mxu0 %v1569
    %1571 = vmatprep.subr.mxu0 0.0
    %v1572 = vand.u32 %v1281, 4294901760
    %1573 = vmatpush1.xpose.msra.mxu0 %v1572
    %1574 = vmatprep.subr.mxu0 0.0
    %v1575 = vand.u32 %v1280, 4294901760
    %1576 = vmatpush1.xpose.msra.mxu0 %v1575
    %1577 = vmatprep.subr.mxu0 0.0
    %1578 = vmatpush2.xpose.msra.mxu0 0.0
    %1579 = vmatprep.subr.mxu0 0.0
    %1580 = vmatpush2.xpose.msra.mxu0 0.0
    %1581 = vmatprep.subr.mxu0 0.0
    %1582 = vmatpush2.xpose.msra.mxu0 0.0
    %1583 = vmatprep.subr.mxu0 0.0
    %1584 = vmatpush2.xpose.msra.mxu0 0.0
    %1585 = vmatprep.subr.mxu0 0.0
    %1586 = vmatpush2.xpose.msra.mxu0 0.0
    %1587 = vmatprep.subr.mxu0 0.0
    %1588 = vmatpush2.xpose.msra.mxu0 0.0
    %1589 = vmatprep.subr.mxu0 0.0
    %1590 = vmatpush2.xpose.msra.mxu0 0.0
    %1591 = vmatprep.subr.mxu0 0.0
    %1592 = vmatpush2.xpose.msra.mxu0 0.0
    %1593 = vmatprep.subr.mxu0 0.0
    %1594 = vmatpush2.xpose.msra.mxu0 0.0
    %1595 = vmatprep.subr.mxu0 0.0
    %1596 = vmatpush2.xpose.msra.mxu0 0.0
    %1597 = vmatprep.subr.mxu0 0.0
    %1598 = vmatpush2.xpose.msra.mxu0 0.0
    %1599 = vmatprep.subr.mxu0 0.0
    %1600 = vmatpush2.xpose.msra.mxu0 0.0
    %1601 = vmatprep.subr.mxu0 0.0
    %1602 = vmatpush2.xpose.msra.mxu0 0.0
    %1603 = vmatprep.subr.mxu0 0.0
    %1604 = vmatpush2.xpose.msra.mxu0 0.0
    %1605 = vmatprep.subr.mxu0 0.0
    %1606 = vmatpush2.xpose.msra.mxu0 0.0
    %1607 = vmatprep.subr.mxu0 0.0
    %1608 = vmatpush2.xpose.msra.mxu0 0.0
    %1609 = vmatprep.mubr.f32.mxu0 0.0
    %v1610 = vand.u32 %v1279, 4294901760
    %v1611 = vsub.f32 %v1279, %v1610
    %v1612 = vand.u32 %v1611, 4294901760
    %1613 = vmatmul.mubr.f32.gmra.mxu0 %v1612
    %v1614 = vpop.f32.mrf.mxu0
    %v1615 = vadd.f32 %v1538, %v1614
    %v1616 = vpop.f32.mrf.mxu0
    %1617 = vdwg.mxu0
    %1618 = vmatprep.subr.mxu0 0.0
    %1619 = vmatpush1.xpose.msra.mxu0 0.0
    %1620 = vmatprep.subr.mxu0 0.0
    %1621 = vmatpush1.xpose.msra.mxu0 0.0
    %1622 = vmatprep.subr.mxu0 0.0
    %1623 = vmatpush1.xpose.msra.mxu0 0.0
    %1624 = vmatprep.subr.mxu0 0.0
    %1625 = vmatpush1.xpose.msra.mxu0 0.0
    %1626 = vmatprep.subr.mxu0 0.0
    %1627 = vmatpush1.xpose.msra.mxu0 0.0
    %1628 = vmatprep.subr.mxu0 0.0
    %1629 = vmatpush1.xpose.msra.mxu0 0.0
    %1630 = vmatprep.subr.mxu0 0.0
    %1631 = vmatpush1.xpose.msra.mxu0 0.0
    %1632 = vmatprep.subr.mxu0 0.0
    %1633 = vmatpush1.xpose.msra.mxu0 0.0
    %1634 = vmatprep.subr.mxu0 0.0
    %1635 = vmatpush1.xpose.msra.mxu0 0.0
    %1636 = vmatprep.subr.mxu0 0.0
    %1637 = vmatpush1.xpose.msra.mxu0 0.0
    %1638 = vmatprep.subr.mxu0 0.0
    %1639 = vmatpush1.xpose.msra.mxu0 0.0
    %1640 = vmatprep.subr.mxu0 0.0
    %1641 = vmatpush1.xpose.msra.mxu0 0.0
    %1642 = vmatprep.subr.mxu0 0.0
    %v1643 = vand.u32 %v1283, 4294901760
    %v1644 = vsub.f32 %v1283, %v1643
    %v1645 = vand.u32 %v1644, 4294901760
    %1646 = vmatpush1.xpose.msra.mxu0 %v1645
    %1647 = vmatprep.subr.mxu0 0.0
    %v1648 = vand.u32 %v1282, 4294901760
    %v1649 = vsub.f32 %v1282, %v1648
    %v1650 = vand.u32 %v1649, 4294901760
    %1651 = vmatpush1.xpose.msra.mxu0 %v1650
    %1652 = vmatprep.subr.mxu0 0.0
    %v1653 = vand.u32 %v1281, 4294901760
    %v1654 = vsub.f32 %v1281, %v1653
    %v1655 = vand.u32 %v1654, 4294901760
    %1656 = vmatpush1.xpose.msra.mxu0 %v1655
    %1657 = vmatprep.subr.mxu0 0.0
    %v1658 = vand.u32 %v1280, 4294901760
    %v1659 = vsub.f32 %v1280, %v1658
    %v1660 = vand.u32 %v1659, 4294901760
    %1661 = vmatpush1.xpose.msra.mxu0 %v1660
    %1662 = vmatprep.subr.mxu0 0.0
    %1663 = vmatpush2.xpose.msra.mxu0 0.0
    %1664 = vmatprep.subr.mxu0 0.0
    %1665 = vmatpush2.xpose.msra.mxu0 0.0
    %1666 = vmatprep.subr.mxu0 0.0
    %1667 = vmatpush2.xpose.msra.mxu0 0.0
    %1668 = vmatprep.subr.mxu0 0.0
    %1669 = vmatpush2.xpose.msra.mxu0 0.0
    %1670 = vmatprep.subr.mxu0 0.0
    %1671 = vmatpush2.xpose.msra.mxu0 0.0
    %1672 = vmatprep.subr.mxu0 0.0
    %1673 = vmatpush2.xpose.msra.mxu0 0.0
    %1674 = vmatprep.subr.mxu0 0.0
    %1675 = vmatpush2.xpose.msra.mxu0 0.0
    %1676 = vmatprep.subr.mxu0 0.0
    %1677 = vmatpush2.xpose.msra.mxu0 0.0
    %1678 = vmatprep.subr.mxu0 0.0
    %1679 = vmatpush2.xpose.msra.mxu0 0.0
    %1680 = vmatprep.subr.mxu0 0.0
    %1681 = vmatpush2.xpose.msra.mxu0 0.0
    %1682 = vmatprep.subr.mxu0 0.0
    %1683 = vmatpush2.xpose.msra.mxu0 0.0
    %1684 = vmatprep.subr.mxu0 0.0
    %1685 = vmatpush2.xpose.msra.mxu0 0.0
    %1686 = vmatprep.subr.mxu0 0.0
    %1687 = vmatpush2.xpose.msra.mxu0 0.0
    %1688 = vmatprep.subr.mxu0 0.0
    %1689 = vmatpush2.xpose.msra.mxu0 0.0
    %1690 = vmatprep.subr.mxu0 0.0
    %1691 = vmatpush2.xpose.msra.mxu0 0.0
    %1692 = vmatprep.subr.mxu0 0.0
    %1693 = vmatpush2.xpose.msra.mxu0 0.0
    %1694 = vmatprep.mubr.f32.mxu0 0.0
    %v1695 = vand.u32 %v1279, 4294901760
    %1696 = vmatmul.mubr.f32.gmra.mxu0 %v1695
    %v1697 = vpop.f32.mrf.mxu0
    %v1698 = vadd.f32 %v1615, %v1697
    %v1699 = vpop.f32.mrf.mxu0
    %1700 = vdwg.mxu0
    %1701 = vmatprep.subr.mxu0 0.0
    %1702 = vmatpush1.xpose.msra.mxu0 0.0
    %1703 = vmatprep.subr.mxu0 0.0
    %1704 = vmatpush1.xpose.msra.mxu0 0.0
    %1705 = vmatprep.subr.mxu0 0.0
    %1706 = vmatpush1.xpose.msra.mxu0 0.0
    %1707 = vmatprep.subr.mxu0 0.0
    %1708 = vmatpush1.xpose.msra.mxu0 0.0
    %1709 = vmatprep.subr.mxu0 0.0
    %1710 = vmatpush1.xpose.msra.mxu0 0.0
    %1711 = vmatprep.subr.mxu0 0.0
    %1712 = vmatpush1.xpose.msra.mxu0 0.0
    %1713 = vmatprep.subr.mxu0 0.0
    %1714 = vmatpush1.xpose.msra.mxu0 0.0
    %1715 = vmatprep.subr.mxu0 0.0
    %1716 = vmatpush1.xpose.msra.mxu0 0.0
    %1717 = vmatprep.subr.mxu0 0.0
    %1718 = vmatpush1.xpose.msra.mxu0 0.0
    %1719 = vmatprep.subr.mxu0 0.0
    %1720 = vmatpush1.xpose.msra.mxu0 0.0
    %1721 = vmatprep.subr.mxu0 0.0
    %1722 = vmatpush1.xpose.msra.mxu0 0.0
    %1723 = vmatprep.subr.mxu0 0.0
    %1724 = vmatpush1.xpose.msra.mxu0 0.0
    %1725 = vmatprep.subr.mxu0 0.0
    %v1726 = vand.u32 %v1283, 4294901760
    %1727 = vmatpush1.xpose.msra.mxu0 %v1726
    %1728 = vmatprep.subr.mxu0 0.0
    %v1729 = vand.u32 %v1282, 4294901760
    %1730 = vmatpush1.xpose.msra.mxu0 %v1729
    %1731 = vmatprep.subr.mxu0 0.0
    %v1732 = vand.u32 %v1281, 4294901760
    %1733 = vmatpush1.xpose.msra.mxu0 %v1732
    %1734 = vmatprep.subr.mxu0 0.0
    %v1735 = vand.u32 %v1280, 4294901760
    %1736 = vmatpush1.xpose.msra.mxu0 %v1735
    %1737 = vmatprep.subr.mxu0 0.0
    %1738 = vmatpush2.xpose.msra.mxu0 0.0
    %1739 = vmatprep.subr.mxu0 0.0
    %1740 = vmatpush2.xpose.msra.mxu0 0.0
    %1741 = vmatprep.subr.mxu0 0.0
    %1742 = vmatpush2.xpose.msra.mxu0 0.0
    %1743 = vmatprep.subr.mxu0 0.0
    %1744 = vmatpush2.xpose.msra.mxu0 0.0
    %1745 = vmatprep.subr.mxu0 0.0
    %1746 = vmatpush2.xpose.msra.mxu0 0.0
    %1747 = vmatprep.subr.mxu0 0.0
    %1748 = vmatpush2.xpose.msra.mxu0 0.0
    %1749 = vmatprep.subr.mxu0 0.0
    %1750 = vmatpush2.xpose.msra.mxu0 0.0
    %1751 = vmatprep.subr.mxu0 0.0
    %1752 = vmatpush2.xpose.msra.mxu0 0.0
    %1753 = vmatprep.subr.mxu0 0.0
    %1754 = vmatpush2.xpose.msra.mxu0 0.0
    %1755 = vmatprep.subr.mxu0 0.0
    %1756 = vmatpush2.xpose.msra.mxu0 0.0
    %1757 = vmatprep.subr.mxu0 0.0
    %1758 = vmatpush2.xpose.msra.mxu0 0.0
    %1759 = vmatprep.subr.mxu0 0.0
    %1760 = vmatpush2.xpose.msra.mxu0 0.0
    %1761 = vmatprep.subr.mxu0 0.0
    %1762 = vmatpush2.xpose.msra.mxu0 0.0
    %1763 = vmatprep.subr.mxu0 0.0
    %1764 = vmatpush2.xpose.msra.mxu0 0.0
    %1765 = vmatprep.subr.mxu0 0.0
    %1766 = vmatpush2.xpose.msra.mxu0 0.0
    %1767 = vmatprep.subr.mxu0 0.0
    %1768 = vmatpush2.xpose.msra.mxu0 0.0
    %1769 = vmatprep.mubr.f32.mxu0 0.0
    %v1770 = vand.u32 %v1279, 4294901760
    %1771 = vmatmul.mubr.f32.gmra.mxu0 %v1770
    %v1772 = vpop.f32.mrf.mxu0
    %v1773 = vadd.f32 %v1698, %v1772
    %v1774 = vpop.f32.mrf.mxu0
    %1775 = vdwg.mxu0
    %vm1776 = vcmask 254976
    %v1777 = vsel %vm1776, %v1773, 0.0
    %1778 = vadd.xlane.f32.xlu0 %v1777
    %v1779 = vpop.xlane.xlu0 %1778
    %v1780 = vrcp.pop 32.0
    %v1781 = vmul.f32 %v1779, %v1780
    %v1782 = vsub.f32 %v1773, %v1781
    %v1783 = vmul.f32 %v1782, %v1782
    %v1784 = vsel %vm1776, %v1783, 0.0
    %1785 = vadd.xlane.f32.xlu0 %v1784
    %v1786 = vpop.xlane.xlu0 %1785
    %v1787 = vmul.f32 %v1786, %v1780
    %v1788 = vadd.f32 %v1787, 1e-05
    %v1789 = vrsqrt.pop %v1788
    %v1790 = vmul.f32 %v1782, %v1789
    %v1791 = vld [vmem:[%s5] sm:$0x1]
    %v1793 = vlaneseq
    %v1794 = vshrl.u32 %v1793, 7
    %v1795 = vsub.s32 0, %v1794
    %v1796 = vrot.slane %v1791, %v1795
    %v1798 = vmul.f32 %v1790, %v1796
    %v1799 = vld [vmem:[%s6] sm:$0x1]
    %v1801 = vlaneseq
    %v1802 = vshrl.u32 %v1801, 7
    %v1803 = vsub.s32 0, %v1802
    %v1804 = vrot.slane %v1799, %v1803
    %v1806 = vadd.f32 %v1798, %v1804
    %v1807 = vld [vmem:[%s7] sm:$0x1]
    %v1808 = vld [vmem:[#allocation2] sm:$0x1]
    %1810 = vset.pattern.permute.xlu0 0
    %1811 = vperm.xlu0 %1810, %v1808
    %v1812 = vpop.permute.xlu0 %1811
    %v1814 = vlaneseq
    %v1815 = vshrl.u32 %v1814, 7
    %v1816 = vsub.s32 0, %v1815
    %v1817 = vrot.slane %v1812, %v1816
    %v1819 = vsel %vm71, %v1807, 0
    %v1822 = vsel %vm71, %v1806, 0
    %1824 = vmatprep.subr.mxu0 0.0
    %1825 = vmatpush1.xpose.msra.mxu0 0.0
    %1826 = vmatprep.subr.mxu0 0.0
    %1827 = vmatpush1.xpose.msra.mxu0 0.0
    %1828 = vmatprep.subr.mxu0 0.0
    %1829 = vmatpush1.xpose.msra.mxu0 0.0
    %1830 = vmatprep.subr.mxu0 0.0
    %1831 = vmatpush1.xpose.msra.mxu0 0.0
    %1832 = vmatprep.subr.mxu0 0.0
    %1833 = vmatpush1.xpose.msra.mxu0 0.0
    %1834 = vmatprep.subr.mxu0 0.0
    %1835 = vmatpush1.xpose.msra.mxu0 0.0
    %1836 = vmatprep.subr.mxu0 0.0
    %1837 = vmatpush1.xpose.msra.mxu0 0.0
    %1838 = vmatprep.subr.mxu0 0.0
    %1839 = vmatpush1.xpose.msra.mxu0 0.0
    %1840 = vmatprep.subr.mxu0 0.0
    %1841 = vmatpush1.xpose.msra.mxu0 0.0
    %1842 = vmatprep.subr.mxu0 0.0
    %1843 = vmatpush1.xpose.msra.mxu0 0.0
    %1844 = vmatprep.subr.mxu0 0.0
    %1845 = vmatpush1.xpose.msra.mxu0 0.0
    %1846 = vmatprep.subr.mxu0 0.0
    %1847 = vmatpush1.xpose.msra.mxu0 0.0
    %1848 = vmatprep.subr.mxu0 0.0
    %1849 = vmatpush1.xpose.msra.mxu0 0.0
    %1850 = vmatprep.subr.mxu0 0.0
    %1851 = vmatpush1.xpose.msra.mxu0 0.0
    %1852 = vmatprep.subr.mxu0 0.0
    %1853 = vmatpush1.xpose.msra.mxu0 0.0
    %1854 = vmatprep.subr.mxu0 0.0
    %v1855 = vand.u32 %v1822, 4294901760
    %1856 = vmatpush1.xpose.msra.mxu0 %v1855
    %1857 = vmatprep.subr.mxu0 0.0
    %1858 = vmatpush2.xpose.msra.mxu0 0.0
    %1859 = vmatprep.subr.mxu0 0.0
    %1860 = vmatpush2.xpose.msra.mxu0 0.0
    %1861 = vmatprep.subr.mxu0 0.0
    %1862 = vmatpush2.xpose.msra.mxu0 0.0
    %1863 = vmatprep.subr.mxu0 0.0
    %1864 = vmatpush2.xpose.msra.mxu0 0.0
    %1865 = vmatprep.subr.mxu0 0.0
    %1866 = vmatpush2.xpose.msra.mxu0 0.0
    %1867 = vmatprep.subr.mxu0 0.0
    %1868 = vmatpush2.xpose.msra.mxu0 0.0
    %1869 = vmatprep.subr.mxu0 0.0
    %1870 = vmatpush2.xpose.msra.mxu0 0.0
    %1871 = vmatprep.subr.mxu0 0.0
    %1872 = vmatpush2.xpose.msra.mxu0 0.0
    %1873 = vmatprep.subr.mxu0 0.0
    %1874 = vmatpush2.xpose.msra.mxu0 0.0
    %1875 = vmatprep.subr.mxu0 0.0
    %1876 = vmatpush2.xpose.msra.mxu0 0.0
    %1877 = vmatprep.subr.mxu0 0.0
    %1878 = vmatpush2.xpose.msra.mxu0 0.0
    %1879 = vmatprep.subr.mxu0 0.0
    %1880 = vmatpush2.xpose.msra.mxu0 0.0
    %1881 = vmatprep.subr.mxu0 0.0
    %1882 = vmatpush2.xpose.msra.mxu0 0.0
    %1883 = vmatprep.subr.mxu0 0.0
    %1884 = vmatpush2.xpose.msra.mxu0 0.0
    %1885 = vmatprep.subr.mxu0 0.0
    %1886 = vmatpush2.xpose.msra.mxu0 0.0
    %1887 = vmatprep.subr.mxu0 0.0
    %1888 = vmatpush2.xpose.msra.mxu0 0.0
    %1889 = vmatprep.mubr.f32.mxu0 0.0
    %v1890 = vand.u32 %v1819, 4294901760
    %v1891 = vsub.f32 %v1819, %v1890
    %v1892 = vand.u32 %v1891, 4294901760
    %v1893 = vsub.f32 %v1891, %v1892
    %v1894 = vand.u32 %v1893, 4294901760
    %1895 = vmatmul.mubr.f32.gmra.mxu0 %v1894
    %v1896 = vpop.f32.mrf.mxu0
    %v1897 = vadd.f32 %v1817, %v1896
    %v1898 = vpop.f32.mrf.mxu0
    %1899 = vdwg.mxu0
    %1900 = vmatprep.subr.mxu0 0.0
    %1901 = vmatpush1.xpose.msra.mxu0 0.0
    %1902 = vmatprep.subr.mxu0 0.0
    %1903 = vmatpush1.xpose.msra.mxu0 0.0
    %1904 = vmatprep.subr.mxu0 0.0
    %1905 = vmatpush1.xpose.msra.mxu0 0.0
    %1906 = vmatprep.subr.mxu0 0.0
    %1907 = vmatpush1.xpose.msra.mxu0 0.0
    %1908 = vmatprep.subr.mxu0 0.0
    %1909 = vmatpush1.xpose.msra.mxu0 0.0
    %1910 = vmatprep.subr.mxu0 0.0
    %1911 = vmatpush1.xpose.msra.mxu0 0.0
    %1912 = vmatprep.subr.mxu0 0.0
    %1913 = vmatpush1.xpose.msra.mxu0 0.0
    %1914 = vmatprep.subr.mxu0 0.0
    %1915 = vmatpush1.xpose.msra.mxu0 0.0
    %1916 = vmatprep.subr.mxu0 0.0
    %1917 = vmatpush1.xpose.msra.mxu0 0.0
    %1918 = vmatprep.subr.mxu0 0.0
    %1919 = vmatpush1.xpose.msra.mxu0 0.0
    %1920 = vmatprep.subr.mxu0 0.0
    %1921 = vmatpush1.xpose.msra.mxu0 0.0
    %1922 = vmatprep.subr.mxu0 0.0
    %1923 = vmatpush1.xpose.msra.mxu0 0.0
    %1924 = vmatprep.subr.mxu0 0.0
    %1925 = vmatpush1.xpose.msra.mxu0 0.0
    %1926 = vmatprep.subr.mxu0 0.0
    %1927 = vmatpush1.xpose.msra.mxu0 0.0
    %1928 = vmatprep.subr.mxu0 0.0
    %1929 = vmatpush1.xpose.msra.mxu0 0.0
    %1930 = vmatprep.subr.mxu0 0.0
    %v1931 = vand.u32 %v1822, 4294901760
    %v1932 = vsub.f32 %v1822, %v1931
    %v1933 = vand.u32 %v1932, 4294901760
    %v1934 = vsub.f32 %v1932, %v1933
    %v1935 = vand.u32 %v1934, 4294901760
    %1936 = vmatpush1.xpose.msra.mxu0 %v1935
    %1937 = vmatprep.subr.mxu0 0.0
    %1938 = vmatpush2.xpose.msra.mxu0 0.0
    %1939 = vmatprep.subr.mxu0 0.0
    %1940 = vmatpush2.xpose.msra.mxu0 0.0
    %1941 = vmatprep.subr.mxu0 0.0
    %1942 = vmatpush2.xpose.msra.mxu0 0.0
    %1943 = vmatprep.subr.mxu0 0.0
    %1944 = vmatpush2.xpose.msra.mxu0 0.0
    %1945 = vmatprep.subr.mxu0 0.0
    %1946 = vmatpush2.xpose.msra.mxu0 0.0
    %1947 = vmatprep.subr.mxu0 0.0
    %1948 = vmatpush2.xpose.msra.mxu0 0.0
    %1949 = vmatprep.subr.mxu0 0.0
    %1950 = vmatpush2.xpose.msra.mxu0 0.0
    %1951 = vmatprep.subr.mxu0 0.0
    %1952 = vmatpush2.xpose.msra.mxu0 0.0
    %1953 = vmatprep.subr.mxu0 0.0
    %1954 = vmatpush2.xpose.msra.mxu0 0.0
    %1955 = vmatprep.subr.mxu0 0.0
    %1956 = vmatpush2.xpose.msra.mxu0 0.0
    %1957 = vmatprep.subr.mxu0 0.0
    %1958 = vmatpush2.xpose.msra.mxu0 0.0
    %1959 = vmatprep.subr.mxu0 0.0
    %1960 = vmatpush2.xpose.msra.mxu0 0.0
    %1961 = vmatprep.subr.mxu0 0.0
    %1962 = vmatpush2.xpose.msra.mxu0 0.0
    %1963 = vmatprep.subr.mxu0 0.0
    %1964 = vmatpush2.xpose.msra.mxu0 0.0
    %1965 = vmatprep.subr.mxu0 0.0
    %1966 = vmatpush2.xpose.msra.mxu0 0.0
    %1967 = vmatprep.subr.mxu0 0.0
    %1968 = vmatpush2.xpose.msra.mxu0 0.0
    %1969 = vmatprep.mubr.f32.mxu0 0.0
    %v1970 = vand.u32 %v1819, 4294901760
    %1971 = vmatmul.mubr.f32.gmra.mxu0 %v1970
    %v1972 = vpop.f32.mrf.mxu0
    %v1973 = vadd.f32 %v1897, %v1972
    %v1974 = vpop.f32.mrf.mxu0
    %1975 = vdwg.mxu0
    %1976 = vmatprep.subr.mxu0 0.0
    %1977 = vmatpush1.xpose.msra.mxu0 0.0
    %1978 = vmatprep.subr.mxu0 0.0
    %1979 = vmatpush1.xpose.msra.mxu0 0.0
    %1980 = vmatprep.subr.mxu0 0.0
    %1981 = vmatpush1.xpose.msra.mxu0 0.0
    %1982 = vmatprep.subr.mxu0 0.0
    %1983 = vmatpush1.xpose.msra.mxu0 0.0
    %1984 = vmatprep.subr.mxu0 0.0
    %1985 = vmatpush1.xpose.msra.mxu0 0.0
    %1986 = vmatprep.subr.mxu0 0.0
    %1987 = vmatpush1.xpose.msra.mxu0 0.0
    %1988 = vmatprep.subr.mxu0 0.0
    %1989 = vmatpush1.xpose.msra.mxu0 0.0
    %1990 = vmatprep.subr.mxu0 0.0
    %1991 = vmatpush1.xpose.msra.mxu0 0.0
    %1992 = vmatprep.subr.mxu0 0.0
    %1993 = vmatpush1.xpose.msra.mxu0 0.0
    %1994 = vmatprep.subr.mxu0 0.0
    %1995 = vmatpush1.xpose.msra.mxu0 0.0
    %1996 = vmatprep.subr.mxu0 0.0
    %1997 = vmatpush1.xpose.msra.mxu0 0.0
    %1998 = vmatprep.subr.mxu0 0.0
    %1999 = vmatpush1.xpose.msra.mxu0 0.0
    %2000 = vmatprep.subr.mxu0 0.0
    %2001 = vmatpush1.xpose.msra.mxu0 0.0
    %2002 = vmatprep.subr.mxu0 0.0
    %2003 = vmatpush1.xpose.msra.mxu0 0.0
    %2004 = vmatprep.subr.mxu0 0.0
    %2005 = vmatpush1.xpose.msra.mxu0 0.0
    %2006 = vmatprep.subr.mxu0 0.0
    %v2007 = vand.u32 %v1822, 4294901760
    %v2008 = vsub.f32 %v1822, %v2007
    %2009 = vmatpush1.xpose.msra.mxu0 %v2008
    %2010 = vmatprep.subr.mxu0 0.0
    %2011 = vmatpush2.xpose.msra.mxu0 0.0
    %2012 = vmatprep.subr.mxu0 0.0
    %2013 = vmatpush2.xpose.msra.mxu0 0.0
    %2014 = vmatprep.subr.mxu0 0.0
    %2015 = vmatpush2.xpose.msra.mxu0 0.0
    %2016 = vmatprep.subr.mxu0 0.0
    %2017 = vmatpush2.xpose.msra.mxu0 0.0
    %2018 = vmatprep.subr.mxu0 0.0
    %2019 = vmatpush2.xpose.msra.mxu0 0.0
    %2020 = vmatprep.subr.mxu0 0.0
    %2021 = vmatpush2.xpose.msra.mxu0 0.0
    %2022 = vmatprep.subr.mxu0 0.0
    %2023 = vmatpush2.xpose.msra.mxu0 0.0
    %2024 = vmatprep.subr.mxu0 0.0
    %2025 = vmatpush2.xpose.msra.mxu0 0.0
    %2026 = vmatprep.subr.mxu0 0.0
    %2027 = vmatpush2.xpose.msra.mxu0 0.0
    %2028 = vmatprep.subr.mxu0 0.0
    %2029 = vmatpush2.xpose.msra.mxu0 0.0
    %2030 = vmatprep.subr.mxu0 0.0
    %2031 = vmatpush2.xpose.msra.mxu0 0.0
    %2032 = vmatprep.subr.mxu0 0.0
    %2033 = vmatpush2.xpose.msra.mxu0 0.0
    %2034 = vmatprep.subr.mxu0 0.0
    %2035 = vmatpush2.xpose.msra.mxu0 0.0
    %2036 = vmatprep.subr.mxu0 0.0
    %2037 = vmatpush2.xpose.msra.mxu0 0.0
    %2038 = vmatprep.subr.mxu0 0.0
    %2039 = vmatpush2.xpose.msra.mxu0 0.0
    %2040 = vmatprep.subr.mxu0 0.0
    %2041 = vmatpush2.xpose.msra.mxu0 0.0
    %2042 = vmatprep.mubr.f32.mxu0 0.0
    %v2043 = vand.u32 %v1819, 4294901760
    %v2044 = vsub.f32 %v1819, %v2043
    %2045 = vmatmul.mubr.f32.gmra.mxu0 %v2044
    %v2046 = vpop.f32.mrf.mxu0
    %v2047 = vadd.f32 %v1973, %v2046
    %v2048 = vpop.f32.mrf.mxu0
    %2049 = vdwg.mxu0
    %2050 = vmatprep.subr.mxu0 0.0
    %2051 = vmatpush1.xpose.msra.mxu0 0.0
    %2052 = vmatprep.subr.mxu0 0.0
    %2053 = vmatpush1.xpose.msra.mxu0 0.0
    %2054 = vmatprep.subr.mxu0 0.0
    %2055 = vmatpush1.xpose.msra.mxu0 0.0
    %2056 = vmatprep.subr.mxu0 0.0
    %2057 = vmatpush1.xpose.msra.mxu0 0.0
    %2058 = vmatprep.subr.mxu0 0.0
    %2059 = vmatpush1.xpose.msra.mxu0 0.0
    %2060 = vmatprep.subr.mxu0 0.0
    %2061 = vmatpush1.xpose.msra.mxu0 0.0
    %2062 = vmatprep.subr.mxu0 0.0
    %2063 = vmatpush1.xpose.msra.mxu0 0.0
    %2064 = vmatprep.subr.mxu0 0.0
    %2065 = vmatpush1.xpose.msra.mxu0 0.0
    %2066 = vmatprep.subr.mxu0 0.0
    %2067 = vmatpush1.xpose.msra.mxu0 0.0
    %2068 = vmatprep.subr.mxu0 0.0
    %2069 = vmatpush1.xpose.msra.mxu0 0.0
    %2070 = vmatprep.subr.mxu0 0.0
    %2071 = vmatpush1.xpose.msra.mxu0 0.0
    %2072 = vmatprep.subr.mxu0 0.0
    %2073 = vmatpush1.xpose.msra.mxu0 0.0
    %2074 = vmatprep.subr.mxu0 0.0
    %2075 = vmatpush1.xpose.msra.mxu0 0.0
    %2076 = vmatprep.subr.mxu0 0.0
    %2077 = vmatpush1.xpose.msra.mxu0 0.0
    %2078 = vmatprep.subr.mxu0 0.0
    %2079 = vmatpush1.xpose.msra.mxu0 0.0
    %2080 = vmatprep.subr.mxu0 0.0
    %v2081 = vand.u32 %v1822, 4294901760
    %2082 = vmatpush1.xpose.msra.mxu0 %v2081
    %2083 = vmatprep.subr.mxu0 0.0
    %2084 = vmatpush2.xpose.msra.mxu0 0.0
    %2085 = vmatprep.subr.mxu0 0.0
    %2086 = vmatpush2.xpose.msra.mxu0 0.0
    %2087 = vmatprep.subr.mxu0 0.0
    %2088 = vmatpush2.xpose.msra.mxu0 0.0
    %2089 = vmatprep.subr.mxu0 0.0
    %2090 = vmatpush2.xpose.msra.mxu0 0.0
    %2091 = vmatprep.subr.mxu0 0.0
    %2092 = vmatpush2.xpose.msra.mxu0 0.0
    %2093 = vmatprep.subr.mxu0 0.0
    %2094 = vmatpush2.xpose.msra.mxu0 0.0
    %2095 = vmatprep.subr.mxu0 0.0
    %2096 = vmatpush2.xpose.msra.mxu0 0.0
    %2097 = vmatprep.subr.mxu0 0.0
    %2098 = vmatpush2.xpose.msra.mxu0 0.0
    %2099 = vmatprep.subr.mxu0 0.0
    %2100 = vmatpush2.xpose.msra.mxu0 0.0
    %2101 = vmatprep.subr.mxu0 0.0
    %2102 = vmatpush2.xpose.msra.mxu0 0.0
    %2103 = vmatprep.subr.mxu0 0.0
    %2104 = vmatpush2.xpose.msra.mxu0 0.0
    %2105 = vmatprep.subr.mxu0 0.0
    %2106 = vmatpush2.xpose.msra.mxu0 0.0
    %2107 = vmatprep.subr.mxu0 0.0
    %2108 = vmatpush2.xpose.msra.mxu0 0.0
    %2109 = vmatprep.subr.mxu0 0.0
    %2110 = vmatpush2.xpose.msra.mxu0 0.0
    %2111 = vmatprep.subr.mxu0 0.0
    %2112 = vmatpush2.xpose.msra.mxu0 0.0
    %2113 = vmatprep.subr.mxu0 0.0
    %2114 = vmatpush2.xpose.msra.mxu0 0.0
    %2115 = vmatprep.mubr.f32.mxu0 0.0
    %v2116 = vand.u32 %v1819, 4294901760
    %v2117 = vsub.f32 %v1819, %v2116
    %v2118 = vand.u32 %v2117, 4294901760
    %2119 = vmatmul.mubr.f32.gmra.mxu0 %v2118
    %v2120 = vpop.f32.mrf.mxu0
    %v2121 = vadd.f32 %v2047, %v2120
    %v2122 = vpop.f32.mrf.mxu0
    %2123 = vdwg.mxu0
    %2124 = vmatprep.subr.mxu0 0.0
    %2125 = vmatpush1.xpose.msra.mxu0 0.0
    %2126 = vmatprep.subr.mxu0 0.0
    %2127 = vmatpush1.xpose.msra.mxu0 0.0
    %2128 = vmatprep.subr.mxu0 0.0
    %2129 = vmatpush1.xpose.msra.mxu0 0.0
    %2130 = vmatprep.subr.mxu0 0.0
    %2131 = vmatpush1.xpose.msra.mxu0 0.0
    %2132 = vmatprep.subr.mxu0 0.0
    %2133 = vmatpush1.xpose.msra.mxu0 0.0
    %2134 = vmatprep.subr.mxu0 0.0
    %2135 = vmatpush1.xpose.msra.mxu0 0.0
    %2136 = vmatprep.subr.mxu0 0.0
    %2137 = vmatpush1.xpose.msra.mxu0 0.0
    %2138 = vmatprep.subr.mxu0 0.0
    %2139 = vmatpush1.xpose.msra.mxu0 0.0
    %2140 = vmatprep.subr.mxu0 0.0
    %2141 = vmatpush1.xpose.msra.mxu0 0.0
    %2142 = vmatprep.subr.mxu0 0.0
    %2143 = vmatpush1.xpose.msra.mxu0 0.0
    %2144 = vmatprep.subr.mxu0 0.0
    %2145 = vmatpush1.xpose.msra.mxu0 0.0
    %2146 = vmatprep.subr.mxu0 0.0
    %2147 = vmatpush1.xpose.msra.mxu0 0.0
    %2148 = vmatprep.subr.mxu0 0.0
    %2149 = vmatpush1.xpose.msra.mxu0 0.0
    %2150 = vmatprep.subr.mxu0 0.0
    %2151 = vmatpush1.xpose.msra.mxu0 0.0
    %2152 = vmatprep.subr.mxu0 0.0
    %2153 = vmatpush1.xpose.msra.mxu0 0.0
    %2154 = vmatprep.subr.mxu0 0.0
    %v2155 = vand.u32 %v1822, 4294901760
    %v2156 = vsub.f32 %v1822, %v2155
    %v2157 = vand.u32 %v2156, 4294901760
    %2158 = vmatpush1.xpose.msra.mxu0 %v2157
    %2159 = vmatprep.subr.mxu0 0.0
    %2160 = vmatpush2.xpose.msra.mxu0 0.0
    %2161 = vmatprep.subr.mxu0 0.0
    %2162 = vmatpush2.xpose.msra.mxu0 0.0
    %2163 = vmatprep.subr.mxu0 0.0
    %2164 = vmatpush2.xpose.msra.mxu0 0.0
    %2165 = vmatprep.subr.mxu0 0.0
    %2166 = vmatpush2.xpose.msra.mxu0 0.0
    %2167 = vmatprep.subr.mxu0 0.0
    %2168 = vmatpush2.xpose.msra.mxu0 0.0
    %2169 = vmatprep.subr.mxu0 0.0
    %2170 = vmatpush2.xpose.msra.mxu0 0.0
    %2171 = vmatprep.subr.mxu0 0.0
    %2172 = vmatpush2.xpose.msra.mxu0 0.0
    %2173 = vmatprep.subr.mxu0 0.0
    %2174 = vmatpush2.xpose.msra.mxu0 0.0
    %2175 = vmatprep.subr.mxu0 0.0
    %2176 = vmatpush2.xpose.msra.mxu0 0.0
    %2177 = vmatprep.subr.mxu0 0.0
    %2178 = vmatpush2.xpose.msra.mxu0 0.0
    %2179 = vmatprep.subr.mxu0 0.0
    %2180 = vmatpush2.xpose.msra.mxu0 0.0
    %2181 = vmatprep.subr.mxu0 0.0
    %2182 = vmatpush2.xpose.msra.mxu0 0.0
    %2183 = vmatprep.subr.mxu0 0.0
    %2184 = vmatpush2.xpose.msra.mxu0 0.0
    %2185 = vmatprep.subr.mxu0 0.0
    %2186 = vmatpush2.xpose.msra.mxu0 0.0
    %2187 = vmatprep.subr.mxu0 0.0
    %2188 = vmatpush2.xpose.msra.mxu0 0.0
    %2189 = vmatprep.subr.mxu0 0.0
    %2190 = vmatpush2.xpose.msra.mxu0 0.0
    %2191 = vmatprep.mubr.f32.mxu0 0.0
    %v2192 = vand.u32 %v1819, 4294901760
    %2193 = vmatmul.mubr.f32.gmra.mxu0 %v2192
    %v2194 = vpop.f32.mrf.mxu0
    %v2195 = vadd.f32 %v2121, %v2194
    %v2196 = vpop.f32.mrf.mxu0
    %2197 = vdwg.mxu0
    %2198 = vmatprep.subr.mxu0 0.0
    %2199 = vmatpush1.xpose.msra.mxu0 0.0
    %2200 = vmatprep.subr.mxu0 0.0
    %2201 = vmatpush1.xpose.msra.mxu0 0.0
    %2202 = vmatprep.subr.mxu0 0.0
    %2203 = vmatpush1.xpose.msra.mxu0 0.0
    %2204 = vmatprep.subr.mxu0 0.0
    %2205 = vmatpush1.xpose.msra.mxu0 0.0
    %2206 = vmatprep.subr.mxu0 0.0
    %2207 = vmatpush1.xpose.msra.mxu0 0.0
    %2208 = vmatprep.subr.mxu0 0.0
    %2209 = vmatpush1.xpose.msra.mxu0 0.0
    %2210 = vmatprep.subr.mxu0 0.0
    %2211 = vmatpush1.xpose.msra.mxu0 0.0
    %2212 = vmatprep.subr.mxu0 0.0
    %2213 = vmatpush1.xpose.msra.mxu0 0.0
    %2214 = vmatprep.subr.mxu0 0.0
    %2215 = vmatpush1.xpose.msra.mxu0 0.0
    %2216 = vmatprep.subr.mxu0 0.0
    %2217 = vmatpush1.xpose.msra.mxu0 0.0
    %2218 = vmatprep.subr.mxu0 0.0
    %2219 = vmatpush1.xpose.msra.mxu0 0.0
    %2220 = vmatprep.subr.mxu0 0.0
    %2221 = vmatpush1.xpose.msra.mxu0 0.0
    %2222 = vmatprep.subr.mxu0 0.0
    %2223 = vmatpush1.xpose.msra.mxu0 0.0
    %2224 = vmatprep.subr.mxu0 0.0
    %2225 = vmatpush1.xpose.msra.mxu0 0.0
    %2226 = vmatprep.subr.mxu0 0.0
    %2227 = vmatpush1.xpose.msra.mxu0 0.0
    %2228 = vmatprep.subr.mxu0 0.0
    %v2229 = vand.u32 %v1822, 4294901760
    %2230 = vmatpush1.xpose.msra.mxu0 %v2229
    %2231 = vmatprep.subr.mxu0 0.0
    %2232 = vmatpush2.xpose.msra.mxu0 0.0
    %2233 = vmatprep.subr.mxu0 0.0
    %2234 = vmatpush2.xpose.msra.mxu0 0.0
    %2235 = vmatprep.subr.mxu0 0.0
    %2236 = vmatpush2.xpose.msra.mxu0 0.0
    %2237 = vmatprep.subr.mxu0 0.0
    %2238 = vmatpush2.xpose.msra.mxu0 0.0
    %2239 = vmatprep.subr.mxu0 0.0
    %2240 = vmatpush2.xpose.msra.mxu0 0.0
    %2241 = vmatprep.subr.mxu0 0.0
    %2242 = vmatpush2.xpose.msra.mxu0 0.0
    %2243 = vmatprep.subr.mxu0 0.0
    %2244 = vmatpush2.xpose.msra.mxu0 0.0
    %2245 = vmatprep.subr.mxu0 0.0
    %2246 = vmatpush2.xpose.msra.mxu0 0.0
    %2247 = vmatprep.subr.mxu0 0.0
    %2248 = vmatpush2.xpose.msra.mxu0 0.0
    %2249 = vmatprep.subr.mxu0 0.0
    %2250 = vmatpush2.xpose.msra.mxu0 0.0
    %2251 = vmatprep.subr.mxu0 0.0
    %2252 = vmatpush2.xpose.msra.mxu0 0.0
    %2253 = vmatprep.subr.mxu0 0.0
    %2254 = vmatpush2.xpose.msra.mxu0 0.0
    %2255 = vmatprep.subr.mxu0 0.0
    %2256 = vmatpush2.xpose.msra.mxu0 0.0
    %2257 = vmatprep.subr.mxu0 0.0
    %2258 = vmatpush2.xpose.msra.mxu0 0.0
    %2259 = vmatprep.subr.mxu0 0.0
    %2260 = vmatpush2.xpose.msra.mxu0 0.0
    %2261 = vmatprep.subr.mxu0 0.0
    %2262 = vmatpush2.xpose.msra.mxu0 0.0
    %2263 = vmatprep.mubr.f32.mxu0 0.0
    %v2264 = vand.u32 %v1819, 4294901760
    %2265 = vmatmul.mubr.f32.gmra.mxu0 %v2264
    %v2266 = vpop.f32.mrf.mxu0
    %v2267 = vadd.f32 %v2195, %v2266
    %v2268 = vpop.f32.mrf.mxu0
    %2269 = vdwg.mxu0
    %vm2270 = vcmask 8192
    %2271 = vst.msk [vmem:[#allocation8] sm:$0x1] %vm2270, %v2267
    // Predicated region
    $region46: #{tpu_custom_call.1} parent=1 // pred_check
      _
    $region47: #{tpu_custom_call.1} parent=1 // pred_check_branch
      %2273 = sbr.rel (0) target = $region49
    $region48: #{tpu_custom_call.1} parent=1 // pred_region
      %s2275 = ssub.s32 16, 16
      %2276 = vsyncadd [#allocation5], %s2275
      %s2278 = sshll.u32 [#allocation8], 4
      %s2279 = int_to_ptr.vmem [resolvable:$true] %s2278
      %2281 = dma.vmem_to_hbm [thread:$0]  %s2279, 16, %s9, [#allocation5]
    $region49: #{tpu_custom_call.1} parent=1 // pred_fallthru
      _
    // Predicated region
    $region50: #{tpu_custom_call.1} parent=1 // pred_check
      _
    $region51: #{tpu_custom_call.1} parent=1 // pred_check_branch
      %2283 = sbr.rel (0) target = $region53
    $region52: #{tpu_custom_call.1} parent=1 // pred_region
      %2284 = dma.done [#allocation5], 16
    $region53: #{tpu_custom_call.1} parent=1 // pred_fallthru
      _
    %2285 = vsyncpa [#allocation4], 1
    %2286 = vsyncpa [#allocation7], 1
    %2287 = vsyncpa [#allocation5], 1

</llo_original>
